<compile_context>
chip_gen: v6e
topology: v6e:2x2x1
jax: 0.10.0
libtpu: 0.0.40
codegen_flags: <defaults>
</compile_context>

<pallas_src>
import jax
import jax.numpy as jnp
from jax.experimental import pallas as pl
from jax.experimental.pallas import tpu as pltpu

HIDDEN = 256
NUM_HEADS = 4


def _critic_fused_kernel(state_ref, action_ref, w1s_ref, w1a_ref, b1_ref,
                         w2_ref, b2_ref, w3_ref, b3_ref, q_ref):
    # ---- Layer 1: all 4 heads in one MXU pass; concat fused via split-W1 ----
    h1 = (jnp.dot(state_ref[...], w1s_ref[...],
                  preferred_element_type=jnp.float32)
          + jnp.dot(action_ref[...], w1a_ref[...],
                    preferred_element_type=jnp.float32)
          + b1_ref[...])                               # (B, 4*HIDDEN)
    h1 = jnp.maximum(h1, 0.0)

    # ---- Layer 2: per-head (B,256)@(256,256), static 4-iter unrolled loop ----
    h2_parts = []
    for h in range(NUM_HEADS):
        h1_h = h1[:, h * HIDDEN:(h + 1) * HIDDEN]      # (B, HIDDEN)
        h2_h = (jnp.dot(h1_h, w2_ref[h],
                        preferred_element_type=jnp.float32)
                + b2_ref[h:h + 1, :])                  # (B, HIDDEN)
        h2_parts.append(jnp.maximum(h2_h, 0.0))
    h2 = jnp.concatenate(h2_parts, axis=-1)            # (B, 4*HIDDEN)

    # ---- Layer 3: block-diagonal (4*HIDDEN, 4) -> lane-dense (B, 4) ----
    q_ref[...] = (jnp.dot(h2, w3_ref[...],
                          preferred_element_type=jnp.float32)
                  + b3_ref[...])                       # (B, NUM_HEADS)


def pack_critic_params(params, state_dim, action_dim):
    """One-time re-layout of per-head stacked params into the fused kernel
    layout. Do this once (outside the hot path)."""
    w1, b1, w2, b2, w3, b3 = params                    # (4,F,H),(4,H),(4,H,H),(4,H),(4,H,1),(4,1)
    F = state_dim + action_dim

    # (4, F, H) -> (F, 4*H); column block h == head h.
    w1_cat = jnp.transpose(w1, (1, 0, 2)).reshape(F, NUM_HEADS * HIDDEN)
    w1_state = w1_cat[:state_dim]                      # (state_dim, 4*H)
    w1_action = w1_cat[state_dim:]                     # (action_dim, 4*H)
    b1_cat = b1.reshape(1, NUM_HEADS * HIDDEN)         # (1, 4*H)

    # Block-diagonal final layer: (4*H, 4).
    w3_bd = jnp.zeros((NUM_HEADS * HIDDEN, NUM_HEADS), jnp.float32)
    for h in range(NUM_HEADS):
        w3_bd = w3_bd.at[h * HIDDEN:(h + 1) * HIDDEN, h].set(w3[h, :, 0])
    b3_row = b3.reshape(1, NUM_HEADS)                  # (1, 4)

    return (w1_state, w1_action, b1_cat, w2, b2, w3_bd, b3_row)


def critic_forward(state, action, packed_params):
    """Returns (q1, q2, q3, q4), each of shape (B, 1) float32."""
    B = state.shape[0]
    w1s, w1a, b1, w2, b2, w3bd, b3 = packed_params

    q_all = pl.pallas_call(
        _critic_fused_kernel,
        out_shape=jax.ShapeDtypeStruct((B, NUM_HEADS), jnp.float32),
    )(state, action, w1s, w1a, b1, w2, b2, w3bd, b3)

    return (q_all[:, 0:1], q_all[:, 1:2], q_all[:, 2:3], q_all[:, 3:4])


def init_critic_params(key, state_dim, action_dim):
    """Deterministic PyTorch-style uniform(-1/sqrt(fan_in), 1/sqrt(fan_in))
    init, weights stored per-head-stacked as (heads, in, out)."""
    F = state_dim + action_dim

    def _uniform(k, shape, fan_in):
        bound = 1.0 / jnp.sqrt(jnp.float32(fan_in))
        return jax.random.uniform(k, shape, jnp.float32, -bound, bound)

    ks = jax.random.split(key, 6)
    w1 = _uniform(ks[0], (NUM_HEADS, F, HIDDEN), F)
    b1 = _uniform(ks[1], (NUM_HEADS, HIDDEN), F)
    w2 = _uniform(ks[2], (NUM_HEADS, HIDDEN, HIDDEN), HIDDEN)
    b2 = _uniform(ks[3], (NUM_HEADS, HIDDEN), HIDDEN)
    w3 = _uniform(ks[4], (NUM_HEADS, HIDDEN, 1), HIDDEN)
    b3 = _uniform(ks[5], (NUM_HEADS, 1), HIDDEN)
    return (w1, b1, w2, b2, w3, b3)


def _reference_forward(state, action, params):
    sa = jnp.concatenate([state, action], axis=-1)
    w1, b1, w2, b2, w3, b3 = params
    outs = []
    for h in range(NUM_HEADS):
        x = jnp.maximum(sa @ w1[h] + b1[h], 0.0)
        x = jnp.maximum(x @ w2[h] + b2[h], 0.0)
        outs.append(x @ w3[h] + b3[h])
    return tuple(outs)


if __name__ == "__main__":
    state_dim, action_dim, batch = 12, 4, 8

    key = jax.random.PRNGKey(0)
    k_state, k_action, k_params = jax.random.split(key, 3)
    state = jax.random.normal(k_state, (batch, state_dim), jnp.float32)
    action = jax.random.normal(k_action, (batch, action_dim), jnp.float32)

    params = init_critic_params(k_params, state_dim, action_dim)
    packed = pack_critic_params(params, state_dim, action_dim)

    q1, q2, q3, q4 = jax.block_until_ready(
        critic_forward(state, action, packed))

    # sanity-check against a plain-JAX reference of the PyTorch module
    r1, r2, r3, r4 = _reference_forward(state, action, params)
    for got, want in ((q1, r1), (q2, r2), (q3, r3), (q4, r4)):
        assert got.shape == (batch, 1)
        assert jnp.allclose(got, want, atol=1e-4, rtol=1e-4)

    print("KERNEL_OK")
</pallas_src>

<mosaic_0001>
module attributes {stable_mosaic.version = 11 : i64} {
  func.func @_critic_fused_kernel(%arg0: memref<8x12xf32, #tpu.memory_space<vmem>>, %arg1: memref<8x4xf32, #tpu.memory_space<vmem>>, %arg2: memref<12x1024xf32, #tpu.memory_space<vmem>>, %arg3: memref<4x1024xf32, #tpu.memory_space<vmem>>, %arg4: memref<1x1024xf32, #tpu.memory_space<vmem>>, %arg5: memref<4x256x256xf32, #tpu.memory_space<vmem>>, %arg6: memref<4x256xf32, #tpu.memory_space<vmem>>, %arg7: memref<1024x4xf32, #tpu.memory_space<vmem>>, %arg8: memref<1x4xf32, #tpu.memory_space<vmem>>, %arg9: memref<8x4xf32, #tpu.memory_space<vmem>>) attributes {dimension_semantics = [], scalar_prefetch = 0 : i64, scratch_operands = 0 : i64, tpu.core_type = #tpu.core_type<tc>} {
    %c0 = arith.constant 0 : index
    %c0_0 = arith.constant 0 : index
    %0 = vector.load %arg0[%c0, %c0_0] : memref<8x12xf32, #tpu.memory_space<vmem>>, vector<8x12xf32>
    %c0_1 = arith.constant 0 : index
    %c0_2 = arith.constant 0 : index
    %1 = vector.load %arg2[%c0_1, %c0_2] : memref<12x1024xf32, #tpu.memory_space<vmem>>, vector<12x1024xf32>
    %cst = arith.constant dense<0.000000e+00> : vector<8x1024xf32>
    %2 = tpu.matmul %0, %1, %cst {dimension_numbers = #tpu.dot_dimension_numbers<[1], [0], [0], [1], [0, 0, 1, 1], [], []>} : vector<8x12xf32>, vector<12x1024xf32>, vector<8x1024xf32> -> vector<8x1024xf32>
    %c0_3 = arith.constant 0 : index
    %c0_4 = arith.constant 0 : index
    %3 = vector.load %arg1[%c0_3, %c0_4] : memref<8x4xf32, #tpu.memory_space<vmem>>, vector<8x4xf32>
    %c0_5 = arith.constant 0 : index
    %c0_6 = arith.constant 0 : index
    %4 = vector.load %arg3[%c0_5, %c0_6] : memref<4x1024xf32, #tpu.memory_space<vmem>>, vector<4x1024xf32>
    %cst_7 = arith.constant dense<0.000000e+00> : vector<8x1024xf32>
    %5 = tpu.matmul %3, %4, %cst_7 {dimension_numbers = #tpu.dot_dimension_numbers<[1], [0], [0], [1], [0, 0, 1, 1], [], []>} : vector<8x4xf32>, vector<4x1024xf32>, vector<8x1024xf32> -> vector<8x1024xf32>
    %6 = arith.addf %2, %5 : vector<8x1024xf32>
    %c0_8 = arith.constant 0 : index
    %c0_9 = arith.constant 0 : index
    %7 = vector.load %arg4[%c0_8, %c0_9] : memref<1x1024xf32, #tpu.memory_space<vmem>>, vector<1x1024xf32>
    %8 = vector.broadcast %7 : vector<1x1024xf32> to vector<8x1024xf32>
    %9 = arith.addf %6, %8 : vector<8x1024xf32>
    %cst_10 = arith.constant 0.000000e+00 : f32
    %10 = vector.broadcast %cst_10 : f32 to vector<8x1024xf32>
    %11 = arith.maximumf %9, %10 : vector<8x1024xf32>
    %12 = vector.extract_strided_slice %11 {offsets = [0, 0], sizes = [8, 256], strides = [1, 1]} : vector<8x1024xf32> to vector<8x256xf32>
    %c0_11 = arith.constant 0 : index
    %c0_12 = arith.constant 0 : index
    %c0_13 = arith.constant 0 : index
    %13 = vector.load %arg5[%c0_11, %c0_12, %c0_13] : memref<4x256x256xf32, #tpu.memory_space<vmem>>, vector<1x256x256xf32>
    %14 = vector.shape_cast %13 : vector<1x256x256xf32> to vector<256x256xf32>
    %cst_14 = arith.constant dense<0.000000e+00> : vector<8x256xf32>
    %15 = tpu.matmul %12, %14, %cst_14 {dimension_numbers = #tpu.dot_dimension_numbers<[1], [0], [0], [1], [0, 0, 1, 1], [], []>} : vector<8x256xf32>, vector<256x256xf32>, vector<8x256xf32> -> vector<8x256xf32>
    %c0_15 = arith.constant 0 : index
    %c0_16 = arith.constant 0 : index
    %16 = vector.load %arg6[%c0_15, %c0_16] : memref<4x256xf32, #tpu.memory_space<vmem>>, vector<1x256xf32>
    %17 = vector.broadcast %16 : vector<1x256xf32> to vector<8x256xf32>
    %18 = arith.addf %15, %17 : vector<8x256xf32>
    %cst_17 = arith.constant 0.000000e+00 : f32
    %19 = vector.broadcast %cst_17 : f32 to vector<8x256xf32>
    %20 = arith.maximumf %18, %19 : vector<8x256xf32>
    %21 = vector.extract_strided_slice %11 {offsets = [0, 256], sizes = [8, 256], strides = [1, 1]} : vector<8x1024xf32> to vector<8x256xf32>
    %c1 = arith.constant 1 : index
    %c0_18 = arith.constant 0 : index
    %c0_19 = arith.constant 0 : index
    %22 = vector.load %arg5[%c1, %c0_18, %c0_19] : memref<4x256x256xf32, #tpu.memory_space<vmem>>, vector<1x256x256xf32>
    %23 = vector.shape_cast %22 : vector<1x256x256xf32> to vector<256x256xf32>
    %cst_20 = arith.constant dense<0.000000e+00> : vector<8x256xf32>
    %24 = tpu.matmul %21, %23, %cst_20 {dimension_numbers = #tpu.dot_dimension_numbers<[1], [0], [0], [1], [0, 0, 1, 1], [], []>} : vector<8x256xf32>, vector<256x256xf32>, vector<8x256xf32> -> vector<8x256xf32>
    %c1_21 = arith.constant 1 : index
    %c0_22 = arith.constant 0 : index
    %25 = vector.load %arg6[%c1_21, %c0_22] : memref<4x256xf32, #tpu.memory_space<vmem>>, vector<1x256xf32>
    %26 = vector.broadcast %25 : vector<1x256xf32> to vector<8x256xf32>
    %27 = arith.addf %24, %26 : vector<8x256xf32>
    %cst_23 = arith.constant 0.000000e+00 : f32
    %28 = vector.broadcast %cst_23 : f32 to vector<8x256xf32>
    %29 = arith.maximumf %27, %28 : vector<8x256xf32>
    %30 = vector.extract_strided_slice %11 {offsets = [0, 512], sizes = [8, 256], strides = [1, 1]} : vector<8x1024xf32> to vector<8x256xf32>
    %c2 = arith.constant 2 : index
    %c0_24 = arith.constant 0 : index
    %c0_25 = arith.constant 0 : index
    %31 = vector.load %arg5[%c2, %c0_24, %c0_25] : memref<4x256x256xf32, #tpu.memory_space<vmem>>, vector<1x256x256xf32>
    %32 = vector.shape_cast %31 : vector<1x256x256xf32> to vector<256x256xf32>
    %cst_26 = arith.constant dense<0.000000e+00> : vector<8x256xf32>
    %33 = tpu.matmul %30, %32, %cst_26 {dimension_numbers = #tpu.dot_dimension_numbers<[1], [0], [0], [1], [0, 0, 1, 1], [], []>} : vector<8x256xf32>, vector<256x256xf32>, vector<8x256xf32> -> vector<8x256xf32>
    %c2_27 = arith.constant 2 : index
    %c0_28 = arith.constant 0 : index
    %34 = vector.load %arg6[%c2_27, %c0_28] : memref<4x256xf32, #tpu.memory_space<vmem>>, vector<1x256xf32>
    %35 = vector.broadcast %34 : vector<1x256xf32> to vector<8x256xf32>
    %36 = arith.addf %33, %35 : vector<8x256xf32>
    %cst_29 = arith.constant 0.000000e+00 : f32
    %37 = vector.broadcast %cst_29 : f32 to vector<8x256xf32>
    %38 = arith.maximumf %36, %37 : vector<8x256xf32>
    %39 = vector.extract_strided_slice %11 {offsets = [0, 768], sizes = [8, 256], strides = [1, 1]} : vector<8x1024xf32> to vector<8x256xf32>
    %c3 = arith.constant 3 : index
    %c0_30 = arith.constant 0 : index
    %c0_31 = arith.constant 0 : index
    %40 = vector.load %arg5[%c3, %c0_30, %c0_31] : memref<4x256x256xf32, #tpu.memory_space<vmem>>, vector<1x256x256xf32>
    %41 = vector.shape_cast %40 : vector<1x256x256xf32> to vector<256x256xf32>
    %cst_32 = arith.constant dense<0.000000e+00> : vector<8x256xf32>
    %42 = tpu.matmul %39, %41, %cst_32 {dimension_numbers = #tpu.dot_dimension_numbers<[1], [0], [0], [1], [0, 0, 1, 1], [], []>} : vector<8x256xf32>, vector<256x256xf32>, vector<8x256xf32> -> vector<8x256xf32>
    %c3_33 = arith.constant 3 : index
    %c0_34 = arith.constant 0 : index
    %43 = vector.load %arg6[%c3_33, %c0_34] : memref<4x256xf32, #tpu.memory_space<vmem>>, vector<1x256xf32>
    %44 = vector.broadcast %43 : vector<1x256xf32> to vector<8x256xf32>
    %45 = arith.addf %42, %44 : vector<8x256xf32>
    %cst_35 = arith.constant 0.000000e+00 : f32
    %46 = vector.broadcast %cst_35 : f32 to vector<8x256xf32>
    %47 = arith.maximumf %45, %46 : vector<8x256xf32>
    %48 = tpu.concatenate %20, %29, %38, %47 in 1 : vector<8x256xf32>, vector<8x256xf32>, vector<8x256xf32>, vector<8x256xf32> -> vector<8x1024xf32>
    %c0_36 = arith.constant 0 : index
    %c0_37 = arith.constant 0 : index
    %49 = vector.load %arg7[%c0_36, %c0_37] : memref<1024x4xf32, #tpu.memory_space<vmem>>, vector<1024x4xf32>
    %cst_38 = arith.constant dense<0.000000e+00> : vector<8x4xf32>
    %50 = tpu.matmul %48, %49, %cst_38 {dimension_numbers = #tpu.dot_dimension_numbers<[1], [0], [0], [1], [0, 0, 1, 1], [], []>} : vector<8x1024xf32>, vector<1024x4xf32>, vector<8x4xf32> -> vector<8x4xf32>
    %c0_39 = arith.constant 0 : index
    %c0_40 = arith.constant 0 : index
    %51 = vector.load %arg8[%c0_39, %c0_40] : memref<1x4xf32, #tpu.memory_space<vmem>>, vector<1x4xf32>
    %52 = vector.broadcast %51 : vector<1x4xf32> to vector<8x4xf32>
    %53 = arith.addf %50, %52 : vector<8x4xf32>
    %c0_41 = arith.constant 0 : index
    %c0_42 = arith.constant 0 : index
    %54 = vector.load %arg9[%c0_41, %c0_42] : memref<8x4xf32, #tpu.memory_space<vmem>>, vector<8x4xf32>
    tpu.vector_store %arg9[%c0_41, %c0_42], %53 {strides = array<i32>} : memref<8x4xf32, #tpu.memory_space<vmem>>, vector<8x4xf32>,
    return
  }
}

</mosaic_0001>

<llo_original>
// kernel: tpu_custom_call.1
$region0: #{tpu_custom_call.1}
  #allocation0 [shape = 'u32[]', space=smem, size = 0x4, offset = 0x4, fixed_abs, tag = 'smem constant byte address 0x4 - core index']
  #allocation1 [shape = 'u32[144,128]{1,0:T(1,128)}', space=vmem, size = 0x12000, scoped, tag = 'internal scratch']
  %s0 = inlined_call_operand.vmem [shape: f32[8,12], index: 0, kind: input, shape index: {}]
  %s1 = inlined_call_operand.vmem [shape: f32[8,4], index: 1, kind: input, shape index: {}]
  %s2 = inlined_call_operand.vmem [shape: f32[12,1024], index: 2, kind: input, shape index: {}]
  %s3 = inlined_call_operand.vmem [shape: f32[4,1024], index: 3, kind: input, shape index: {}]
  %s4 = inlined_call_operand.vmem [shape: f32[1,1024], index: 4, kind: input, shape index: {}]
  %s5 = inlined_call_operand.hbm [shape: f32[4,256,256], index: 5, kind: input, shape index: {}]
  %s6 = inlined_call_operand.vmem [shape: f32[4,256], index: 6, kind: input, shape index: {}]
  %s7 = inlined_call_operand.vmem [shape: f32[1024,4], index: 7, kind: input, shape index: {}]
  %s8 = inlined_call_operand.vmem [shape: f32[1,4], index: 8, kind: input, shape index: {}]
  %s9 = inlined_call_operand.vmem [shape: f32[8,4], index: 9, kind: output, shape index: {}]
  %s10 = sld [smem:[#allocation0]]
  $region50: #{tpu_custom_call.1} parent=0
    _
  %s12 = ssub.s32 1, %s10
  %s13 = scalar_select 0, %s12, %s10
  $region1: #{tpu_custom_call.1} parent=0
    #allocation2 [shape = 'u8[1048576]{0}', space=vmem, size = 0x100000, scoped, tag = 'input window, operand 5, single buffered']
    #allocation3 [shape = 's32[1]{0}', space=sflag, size = 0x4, scoped, tag = 'scoped memory for tpu_custom_call.1']
    %14 = vsyncpa [#allocation3], 0
    // Predicated region
    $region2: #{tpu_custom_call.1} parent=1 // pred_check
      _
    $region3: #{tpu_custom_call.1} parent=1 // pred_check_branch
      %16 = sbr.rel (0) target = $region5
    $region4: #{tpu_custom_call.1} parent=1 // pred_region
      _
    $region5: #{tpu_custom_call.1} parent=1 // pred_fallthru
      _
    // Predicated region
    $region6: #{tpu_custom_call.1} parent=1 // pred_check
      _
    $region7: #{tpu_custom_call.1} parent=1 // pred_check_branch
      %18 = sbr.rel (0) target = $region9
    $region8: #{tpu_custom_call.1} parent=1 // pred_region
      _
    $region9: #{tpu_custom_call.1} parent=1 // pred_fallthru
      _
    // Predicated region
    $region10: #{tpu_custom_call.1} parent=1 // pred_check
      _
    $region11: #{tpu_custom_call.1} parent=1 // pred_check_branch
      %20 = sbr.rel (0) target = $region13
    $region12: #{tpu_custom_call.1} parent=1 // pred_region
      _
    $region13: #{tpu_custom_call.1} parent=1 // pred_fallthru
      _
    // Predicated region
    $region14: #{tpu_custom_call.1} parent=1 // pred_check
      _
    $region15: #{tpu_custom_call.1} parent=1 // pred_check_branch
      %22 = sbr.rel (0) target = $region17
    $region16: #{tpu_custom_call.1} parent=1 // pred_region
      _
    $region17: #{tpu_custom_call.1} parent=1 // pred_fallthru
      _
    // Predicated region
    $region18: #{tpu_custom_call.1} parent=1 // pred_check
      _
    $region19: #{tpu_custom_call.1} parent=1 // pred_check_branch
      %24 = sbr.rel (0) target = $region21
    $region20: #{tpu_custom_call.1} parent=1 // pred_region
      _
    $region21: #{tpu_custom_call.1} parent=1 // pred_fallthru
      _
    // Predicated region
    $region22: #{tpu_custom_call.1} parent=1 // pred_check
      _
    $region23: #{tpu_custom_call.1} parent=1 // pred_check_branch
      %26 = sbr.rel (0) target = $region25
    $region24: #{tpu_custom_call.1} parent=1 // pred_region
      %s28 = ssub.s32 32768, 32768
      %29 = vsyncadd [#allocation3], %s28
      %s30 = sshll.u32 [#allocation2], 4
      %s31 = int_to_ptr.vmem [resolvable:$true] %s30
      %36 = dma.hbm_to_vmem [thread:$0]  %s5, 32768, %s31, [#allocation3], 256, 256, 16
    $region25: #{tpu_custom_call.1} parent=1 // pred_fallthru
      _
    // Predicated region
    $region26: #{tpu_custom_call.1} parent=1 // pred_check
      _
    $region27: #{tpu_custom_call.1} parent=1 // pred_check_branch
      %38 = sbr.rel (0) target = $region29
    $region28: #{tpu_custom_call.1} parent=1 // pred_region
      _
    $region29: #{tpu_custom_call.1} parent=1 // pred_fallthru
      _
    // Predicated region
    $region30: #{tpu_custom_call.1} parent=1 // pred_check
      _
    $region31: #{tpu_custom_call.1} parent=1 // pred_check_branch
      %40 = sbr.rel (0) target = $region33
    $region32: #{tpu_custom_call.1} parent=1 // pred_region
      _
    $region33: #{tpu_custom_call.1} parent=1 // pred_fallthru
      _
    // Predicated region
    $region34: #{tpu_custom_call.1} parent=1 // pred_check
      _
    $region35: #{tpu_custom_call.1} parent=1 // pred_check_branch
      %42 = sbr.rel (0) target = $region37
    $region36: #{tpu_custom_call.1} parent=1 // pred_region
      _
    $region37: #{tpu_custom_call.1} parent=1 // pred_fallthru
      _
    // Predicated region
    $region38: #{tpu_custom_call.1} parent=1 // pred_check
      _
    $region39: #{tpu_custom_call.1} parent=1 // pred_check_branch
      %44 = sbr.rel (0) target = $region41
    $region40: #{tpu_custom_call.1} parent=1 // pred_region
      %45 = dma.done [#allocation3], 32768
    $region41: #{tpu_custom_call.1} parent=1 // pred_fallthru
      _
    %v46 = vld [vmem:[%s0] sm:$0xff]
    %v47 = vld [vmem:[%s2] sm:$0xff]
    %v48 = vld [vmem:[%s2 + $0x8] sm:$0xff]
    %v49 = vld [vmem:[%s2 + $0x10] sm:$0xff]
    %v50 = vld [vmem:[%s2 + $0x18] sm:$0xff]
    %v51 = vld [vmem:[%s2 + $0x20] sm:$0xff]
    %v52 = vld [vmem:[%s2 + $0x28] sm:$0xff]
    %v53 = vld [vmem:[%s2 + $0x30] sm:$0xff]
    %v54 = vld [vmem:[%s2 + $0x38] sm:$0xff]
    %v55 = vld [vmem:[%s2 + $0x40] sm:$0xf]
    %v56 = vld [vmem:[%s2 + $0x48] sm:$0xf]
    %v57 = vld [vmem:[%s2 + $0x50] sm:$0xf]
    %v58 = vld [vmem:[%s2 + $0x58] sm:$0xf]
    %v59 = vld [vmem:[%s2 + $0x60] sm:$0xf]
    %v60 = vld [vmem:[%s2 + $0x68] sm:$0xf]
    %v61 = vld [vmem:[%s2 + $0x70] sm:$0xf]
    %v62 = vld [vmem:[%s2 + $0x78] sm:$0xf]
    %v63 = vld [vmem:[%s1] sm:$0xff]
    %v64 = vld [vmem:[%s3] sm:$0xff]
    %v65 = vld [vmem:[%s3 + $0x8] sm:$0xff]
    %v66 = vld [vmem:[%s3 + $0x10] sm:$0xff]
    %v67 = vld [vmem:[%s3 + $0x18] sm:$0xff]
    %v72 = vcombine.high %v64, %v64
    %v73 = vcombine.high %v65, %v65
    %v74 = vcombine.high %v66, %v66
    %v75 = vcombine.high %v67, %v67
    %vm76 = vcmask 31744
    %v78 = vsel %vm76, %v63, 0
    %vm80 = vcmask 1043456
    %v81 = vsel %vm80, %v64, 0
    %v83 = vsel %vm80, %v72, 0
    %v85 = vsel %vm80, %v65, 0
    %v87 = vsel %vm80, %v73, 0
    %v89 = vsel %vm80, %v66, 0
    %v91 = vsel %vm80, %v74, 0
    %v93 = vsel %vm80, %v67, 0
    %v95 = vsel %vm80, %v75, 0
    %97 = vmatprep.subr.mxu0 0.0
    %98 = vmatpush1.msra.mxu0 0.0
    %99 = vmatprep.subr.mxu0 0.0
    %100 = vmatpush1.msra.mxu0 0.0
    %101 = vmatprep.subr.mxu0 0.0
    %102 = vmatpush1.msra.mxu0 0.0
    %103 = vmatprep.subr.mxu0 0.0
    %104 = vmatpush1.msra.mxu0 0.0
    %105 = vmatprep.subr.mxu0 0.0
    %106 = vmatpush1.msra.mxu0 0.0
    %107 = vmatprep.subr.mxu0 0.0
    %108 = vmatpush1.msra.mxu0 0.0
    %109 = vmatprep.subr.mxu0 0.0
    %110 = vmatpush1.msra.mxu0 0.0
    %111 = vmatprep.subr.mxu0 0.0
    %112 = vmatpush1.msra.mxu0 0.0
    %113 = vmatprep.subr.mxu0 0.0
    %114 = vmatpush1.msra.mxu0 0.0
    %115 = vmatprep.subr.mxu0 0.0
    %116 = vmatpush1.msra.mxu0 0.0
    %117 = vmatprep.subr.mxu0 0.0
    %118 = vmatpush1.msra.mxu0 0.0
    %119 = vmatprep.subr.mxu0 0.0
    %120 = vmatpush1.msra.mxu0 0.0
    %121 = vmatprep.subr.mxu0 0.0
    %122 = vmatpush1.msra.mxu0 0.0
    %123 = vmatprep.subr.mxu0 0.0
    %124 = vmatpush1.msra.mxu0 0.0
    %125 = vmatprep.subr.mxu0 0.0
    %126 = vmatpush1.msra.mxu0 0.0
    %127 = vmatprep.subr.mxu0 %v83
    %128 = vmatpush1.msra.mxu0 %v81
    %129 = vmatprep.subr.mxu0 0.0
    %130 = vmatpush2.msra.mxu0 0.0
    %131 = vmatprep.subr.mxu0 0.0
    %132 = vmatpush2.msra.mxu0 0.0
    %133 = vmatprep.subr.mxu0 0.0
    %134 = vmatpush2.msra.mxu0 0.0
    %135 = vmatprep.subr.mxu0 0.0
    %136 = vmatpush2.msra.mxu0 0.0
    %137 = vmatprep.subr.mxu0 0.0
    %138 = vmatpush2.msra.mxu0 0.0
    %139 = vmatprep.subr.mxu0 0.0
    %140 = vmatpush2.msra.mxu0 0.0
    %141 = vmatprep.subr.mxu0 0.0
    %142 = vmatpush2.msra.mxu0 0.0
    %143 = vmatprep.subr.mxu0 0.0
    %144 = vmatpush2.msra.mxu0 0.0
    %145 = vmatprep.subr.mxu0 0.0
    %146 = vmatpush2.msra.mxu0 0.0
    %147 = vmatprep.subr.mxu0 0.0
    %148 = vmatpush2.msra.mxu0 0.0
    %149 = vmatprep.subr.mxu0 0.0
    %150 = vmatpush2.msra.mxu0 0.0
    %151 = vmatprep.subr.mxu0 0.0
    %152 = vmatpush2.msra.mxu0 0.0
    %153 = vmatprep.subr.mxu0 0.0
    %154 = vmatpush2.msra.mxu0 0.0
    %155 = vmatprep.subr.mxu0 0.0
    %156 = vmatpush2.msra.mxu0 0.0
    %157 = vmatprep.subr.mxu0 0.0
    %158 = vmatpush2.msra.mxu0 0.0
    %159 = vmatprep.subr.mxu0 0.0
    %160 = vmatpush2.msra.mxu0 0.0
    %161 = vmatprep.mubr.f32.mxu0 0.0
    %162 = vmatmul.mubr.f32.gmra.mxu0 %v78
    %v163 = vpop.f32.mrf.mxu0
    %v164 = vadd.f32 0.0, %v163
    %v165 = vpop.f32.mrf.mxu0
    %v166 = vadd.f32 0.0, %v165
    %167 = vdwg.mxu0
    %168 = vmatprep.subr.mxu0 0.0
    %169 = vmatpush1.msra.mxu0 0.0
    %170 = vmatprep.subr.mxu0 0.0
    %171 = vmatpush1.msra.mxu0 0.0
    %172 = vmatprep.subr.mxu0 0.0
    %173 = vmatpush1.msra.mxu0 0.0
    %174 = vmatprep.subr.mxu0 0.0
    %175 = vmatpush1.msra.mxu0 0.0
    %176 = vmatprep.subr.mxu0 0.0
    %177 = vmatpush1.msra.mxu0 0.0
    %178 = vmatprep.subr.mxu0 0.0
    %179 = vmatpush1.msra.mxu0 0.0
    %180 = vmatprep.subr.mxu0 0.0
    %181 = vmatpush1.msra.mxu0 0.0
    %182 = vmatprep.subr.mxu0 0.0
    %183 = vmatpush1.msra.mxu0 0.0
    %184 = vmatprep.subr.mxu0 0.0
    %185 = vmatpush1.msra.mxu0 0.0
    %186 = vmatprep.subr.mxu0 0.0
    %187 = vmatpush1.msra.mxu0 0.0
    %188 = vmatprep.subr.mxu0 0.0
    %189 = vmatpush1.msra.mxu0 0.0
    %190 = vmatprep.subr.mxu0 0.0
    %191 = vmatpush1.msra.mxu0 0.0
    %192 = vmatprep.subr.mxu0 0.0
    %193 = vmatpush1.msra.mxu0 0.0
    %194 = vmatprep.subr.mxu0 0.0
    %195 = vmatpush1.msra.mxu0 0.0
    %196 = vmatprep.subr.mxu0 0.0
    %197 = vmatpush1.msra.mxu0 0.0
    %198 = vmatprep.subr.mxu0 %v87
    %199 = vmatpush1.msra.mxu0 %v85
    %200 = vmatprep.subr.mxu0 0.0
    %201 = vmatpush2.msra.mxu0 0.0
    %202 = vmatprep.subr.mxu0 0.0
    %203 = vmatpush2.msra.mxu0 0.0
    %204 = vmatprep.subr.mxu0 0.0
    %205 = vmatpush2.msra.mxu0 0.0
    %206 = vmatprep.subr.mxu0 0.0
    %207 = vmatpush2.msra.mxu0 0.0
    %208 = vmatprep.subr.mxu0 0.0
    %209 = vmatpush2.msra.mxu0 0.0
    %210 = vmatprep.subr.mxu0 0.0
    %211 = vmatpush2.msra.mxu0 0.0
    %212 = vmatprep.subr.mxu0 0.0
    %213 = vmatpush2.msra.mxu0 0.0
    %214 = vmatprep.subr.mxu0 0.0
    %215 = vmatpush2.msra.mxu0 0.0
    %216 = vmatprep.subr.mxu0 0.0
    %217 = vmatpush2.msra.mxu0 0.0
    %218 = vmatprep.subr.mxu0 0.0
    %219 = vmatpush2.msra.mxu0 0.0
    %220 = vmatprep.subr.mxu0 0.0
    %221 = vmatpush2.msra.mxu0 0.0
    %222 = vmatprep.subr.mxu0 0.0
    %223 = vmatpush2.msra.mxu0 0.0
    %224 = vmatprep.subr.mxu0 0.0
    %225 = vmatpush2.msra.mxu0 0.0
    %226 = vmatprep.subr.mxu0 0.0
    %227 = vmatpush2.msra.mxu0 0.0
    %228 = vmatprep.subr.mxu0 0.0
    %229 = vmatpush2.msra.mxu0 0.0
    %230 = vmatprep.subr.mxu0 0.0
    %231 = vmatpush2.msra.mxu0 0.0
    %232 = vmatprep.mubr.f32.mxu0 0.0
    %233 = vmatmul.mubr.f32.gmra.mxu0 %v78
    %v234 = vpop.f32.mrf.mxu0
    %v235 = vadd.f32 0.0, %v234
    %v236 = vpop.f32.mrf.mxu0
    %v237 = vadd.f32 0.0, %v236
    %238 = vdwg.mxu0
    %239 = vmatprep.subr.mxu0 0.0
    %240 = vmatpush1.msra.mxu0 0.0
    %241 = vmatprep.subr.mxu0 0.0
    %242 = vmatpush1.msra.mxu0 0.0
    %243 = vmatprep.subr.mxu0 0.0
    %244 = vmatpush1.msra.mxu0 0.0
    %245 = vmatprep.subr.mxu0 0.0
    %246 = vmatpush1.msra.mxu0 0.0
    %247 = vmatprep.subr.mxu0 0.0
    %248 = vmatpush1.msra.mxu0 0.0
    %249 = vmatprep.subr.mxu0 0.0
    %250 = vmatpush1.msra.mxu0 0.0
    %251 = vmatprep.subr.mxu0 0.0
    %252 = vmatpush1.msra.mxu0 0.0
    %253 = vmatprep.subr.mxu0 0.0
    %254 = vmatpush1.msra.mxu0 0.0
    %255 = vmatprep.subr.mxu0 0.0
    %256 = vmatpush1.msra.mxu0 0.0
    %257 = vmatprep.subr.mxu0 0.0
    %258 = vmatpush1.msra.mxu0 0.0
    %259 = vmatprep.subr.mxu0 0.0
    %260 = vmatpush1.msra.mxu0 0.0
    %261 = vmatprep.subr.mxu0 0.0
    %262 = vmatpush1.msra.mxu0 0.0
    %263 = vmatprep.subr.mxu0 0.0
    %264 = vmatpush1.msra.mxu0 0.0
    %265 = vmatprep.subr.mxu0 0.0
    %266 = vmatpush1.msra.mxu0 0.0
    %267 = vmatprep.subr.mxu0 0.0
    %268 = vmatpush1.msra.mxu0 0.0
    %269 = vmatprep.subr.mxu0 %v91
    %270 = vmatpush1.msra.mxu0 %v89
    %271 = vmatprep.subr.mxu0 0.0
    %272 = vmatpush2.msra.mxu0 0.0
    %273 = vmatprep.subr.mxu0 0.0
    %274 = vmatpush2.msra.mxu0 0.0
    %275 = vmatprep.subr.mxu0 0.0
    %276 = vmatpush2.msra.mxu0 0.0
    %277 = vmatprep.subr.mxu0 0.0
    %278 = vmatpush2.msra.mxu0 0.0
    %279 = vmatprep.subr.mxu0 0.0
    %280 = vmatpush2.msra.mxu0 0.0
    %281 = vmatprep.subr.mxu0 0.0
    %282 = vmatpush2.msra.mxu0 0.0
    %283 = vmatprep.subr.mxu0 0.0
    %284 = vmatpush2.msra.mxu0 0.0
    %285 = vmatprep.subr.mxu0 0.0
    %286 = vmatpush2.msra.mxu0 0.0
    %287 = vmatprep.subr.mxu0 0.0
    %288 = vmatpush2.msra.mxu0 0.0
    %289 = vmatprep.subr.mxu0 0.0
    %290 = vmatpush2.msra.mxu0 0.0
    %291 = vmatprep.subr.mxu0 0.0
    %292 = vmatpush2.msra.mxu0 0.0
    %293 = vmatprep.subr.mxu0 0.0
    %294 = vmatpush2.msra.mxu0 0.0
    %295 = vmatprep.subr.mxu0 0.0
    %296 = vmatpush2.msra.mxu0 0.0
    %297 = vmatprep.subr.mxu0 0.0
    %298 = vmatpush2.msra.mxu0 0.0
    %299 = vmatprep.subr.mxu0 0.0
    %300 = vmatpush2.msra.mxu0 0.0
    %301 = vmatprep.subr.mxu0 0.0
    %302 = vmatpush2.msra.mxu0 0.0
    %303 = vmatprep.mubr.f32.mxu0 0.0
    %304 = vmatmul.mubr.f32.gmra.mxu0 %v78
    %v305 = vpop.f32.mrf.mxu0
    %v306 = vadd.f32 0.0, %v305
    %v307 = vpop.f32.mrf.mxu0
    %v308 = vadd.f32 0.0, %v307
    %309 = vdwg.mxu0
    %310 = vmatprep.subr.mxu0 0.0
    %311 = vmatpush1.msra.mxu0 0.0
    %312 = vmatprep.subr.mxu0 0.0
    %313 = vmatpush1.msra.mxu0 0.0
    %314 = vmatprep.subr.mxu0 0.0
    %315 = vmatpush1.msra.mxu0 0.0
    %316 = vmatprep.subr.mxu0 0.0
    %317 = vmatpush1.msra.mxu0 0.0
    %318 = vmatprep.subr.mxu0 0.0
    %319 = vmatpush1.msra.mxu0 0.0
    %320 = vmatprep.subr.mxu0 0.0
    %321 = vmatpush1.msra.mxu0 0.0
    %322 = vmatprep.subr.mxu0 0.0
    %323 = vmatpush1.msra.mxu0 0.0
    %324 = vmatprep.subr.mxu0 0.0
    %325 = vmatpush1.msra.mxu0 0.0
    %326 = vmatprep.subr.mxu0 0.0
    %327 = vmatpush1.msra.mxu0 0.0
    %328 = vmatprep.subr.mxu0 0.0
    %329 = vmatpush1.msra.mxu0 0.0
    %330 = vmatprep.subr.mxu0 0.0
    %331 = vmatpush1.msra.mxu0 0.0
    %332 = vmatprep.subr.mxu0 0.0
    %333 = vmatpush1.msra.mxu0 0.0
    %334 = vmatprep.subr.mxu0 0.0
    %335 = vmatpush1.msra.mxu0 0.0
    %336 = vmatprep.subr.mxu0 0.0
    %337 = vmatpush1.msra.mxu0 0.0
    %338 = vmatprep.subr.mxu0 0.0
    %339 = vmatpush1.msra.mxu0 0.0
    %340 = vmatprep.subr.mxu0 %v95
    %341 = vmatpush1.msra.mxu0 %v93
    %342 = vmatprep.subr.mxu0 0.0
    %343 = vmatpush2.msra.mxu0 0.0
    %344 = vmatprep.subr.mxu0 0.0
    %345 = vmatpush2.msra.mxu0 0.0
    %346 = vmatprep.subr.mxu0 0.0
    %347 = vmatpush2.msra.mxu0 0.0
    %348 = vmatprep.subr.mxu0 0.0
    %349 = vmatpush2.msra.mxu0 0.0
    %350 = vmatprep.subr.mxu0 0.0
    %351 = vmatpush2.msra.mxu0 0.0
    %352 = vmatprep.subr.mxu0 0.0
    %353 = vmatpush2.msra.mxu0 0.0
    %354 = vmatprep.subr.mxu0 0.0
    %355 = vmatpush2.msra.mxu0 0.0
    %356 = vmatprep.subr.mxu0 0.0
    %357 = vmatpush2.msra.mxu0 0.0
    %358 = vmatprep.subr.mxu0 0.0
    %359 = vmatpush2.msra.mxu0 0.0
    %360 = vmatprep.subr.mxu0 0.0
    %361 = vmatpush2.msra.mxu0 0.0
    %362 = vmatprep.subr.mxu0 0.0
    %363 = vmatpush2.msra.mxu0 0.0
    %364 = vmatprep.subr.mxu0 0.0
    %365 = vmatpush2.msra.mxu0 0.0
    %366 = vmatprep.subr.mxu0 0.0
    %367 = vmatpush2.msra.mxu0 0.0
    %368 = vmatprep.subr.mxu0 0.0
    %369 = vmatpush2.msra.mxu0 0.0
    %370 = vmatprep.subr.mxu0 0.0
    %371 = vmatpush2.msra.mxu0 0.0
    %372 = vmatprep.subr.mxu0 0.0
    %373 = vmatpush2.msra.mxu0 0.0
    %374 = vmatprep.mubr.f32.mxu0 0.0
    %375 = vmatmul.mubr.f32.gmra.mxu0 %v78
    %v376 = vpop.f32.mrf.mxu0
    %v377 = vadd.f32 0.0, %v376
    %v378 = vpop.f32.mrf.mxu0
    %v379 = vadd.f32 0.0, %v378
    %380 = vdwg.mxu0
    %vm381 = vcmask 97280
    %v383 = vsel %vm381, %v46, 0
    %v386 = vsel %vm80, %v55, 0
    %v389 = vsel %vm80, %v56, 0
    %v392 = vsel %vm80, %v57, 0
    %v395 = vsel %vm80, %v58, 0
    %v398 = vsel %vm80, %v59, 0
    %v401 = vsel %vm80, %v60, 0
    %v404 = vsel %vm80, %v61, 0
    %v407 = vsel %vm80, %v62, 0
    %409 = vmatprep.subr.mxu0 0.0
    %410 = vmatpush1.msra.mxu0 0.0
    %411 = vmatprep.subr.mxu0 0.0
    %412 = vmatpush1.msra.mxu0 0.0
    %413 = vmatprep.subr.mxu0 0.0
    %414 = vmatpush1.msra.mxu0 0.0
    %415 = vmatprep.subr.mxu0 0.0
    %416 = vmatpush1.msra.mxu0 0.0
    %417 = vmatprep.subr.mxu0 0.0
    %418 = vmatpush1.msra.mxu0 0.0
    %419 = vmatprep.subr.mxu0 0.0
    %420 = vmatpush1.msra.mxu0 0.0
    %421 = vmatprep.subr.mxu0 0.0
    %422 = vmatpush1.msra.mxu0 0.0
    %423 = vmatprep.subr.mxu0 0.0
    %424 = vmatpush1.msra.mxu0 0.0
    %425 = vmatprep.subr.mxu0 0.0
    %426 = vmatpush1.msra.mxu0 0.0
    %427 = vmatprep.subr.mxu0 0.0
    %428 = vmatpush1.msra.mxu0 0.0
    %429 = vmatprep.subr.mxu0 0.0
    %430 = vmatpush1.msra.mxu0 0.0
    %431 = vmatprep.subr.mxu0 0.0
    %432 = vmatpush1.msra.mxu0 0.0
    %433 = vmatprep.subr.mxu0 0.0
    %434 = vmatpush1.msra.mxu0 0.0
    %435 = vmatprep.subr.mxu0 0.0
    %436 = vmatpush1.msra.mxu0 0.0
    %437 = vmatprep.subr.mxu0 %v389
    %438 = vmatpush1.msra.mxu0 %v386
    %439 = vmatprep.subr.mxu0 %v48
    %440 = vmatpush1.msra.mxu0 %v47
    %441 = vmatprep.subr.mxu0 0.0
    %442 = vmatpush2.msra.mxu0 0.0
    %443 = vmatprep.subr.mxu0 0.0
    %444 = vmatpush2.msra.mxu0 0.0
    %445 = vmatprep.subr.mxu0 0.0
    %446 = vmatpush2.msra.mxu0 0.0
    %447 = vmatprep.subr.mxu0 0.0
    %448 = vmatpush2.msra.mxu0 0.0
    %449 = vmatprep.subr.mxu0 0.0
    %450 = vmatpush2.msra.mxu0 0.0
    %451 = vmatprep.subr.mxu0 0.0
    %452 = vmatpush2.msra.mxu0 0.0
    %453 = vmatprep.subr.mxu0 0.0
    %454 = vmatpush2.msra.mxu0 0.0
    %455 = vmatprep.subr.mxu0 0.0
    %456 = vmatpush2.msra.mxu0 0.0
    %457 = vmatprep.subr.mxu0 0.0
    %458 = vmatpush2.msra.mxu0 0.0
    %459 = vmatprep.subr.mxu0 0.0
    %460 = vmatpush2.msra.mxu0 0.0
    %461 = vmatprep.subr.mxu0 0.0
    %462 = vmatpush2.msra.mxu0 0.0
    %463 = vmatprep.subr.mxu0 0.0
    %464 = vmatpush2.msra.mxu0 0.0
    %465 = vmatprep.subr.mxu0 0.0
    %466 = vmatpush2.msra.mxu0 0.0
    %467 = vmatprep.subr.mxu0 0.0
    %468 = vmatpush2.msra.mxu0 0.0
    %469 = vmatprep.subr.mxu0 0.0
    %470 = vmatpush2.msra.mxu0 0.0
    %471 = vmatprep.subr.mxu0 0.0
    %472 = vmatpush2.msra.mxu0 0.0
    %473 = vmatprep.mubr.f32.mxu0 0.0
    %474 = vmatmul.mubr.f32.gmra.mxu0 %v383
    %v475 = vpop.f32.mrf.mxu0
    %v476 = vadd.f32 %v164, %v475
    %v477 = vpop.f32.mrf.mxu0
    %v478 = vadd.f32 %v166, %v477
    %479 = vdwg.mxu0
    %480 = vmatprep.subr.mxu0 0.0
    %481 = vmatpush1.msra.mxu0 0.0
    %482 = vmatprep.subr.mxu0 0.0
    %483 = vmatpush1.msra.mxu0 0.0
    %484 = vmatprep.subr.mxu0 0.0
    %485 = vmatpush1.msra.mxu0 0.0
    %486 = vmatprep.subr.mxu0 0.0
    %487 = vmatpush1.msra.mxu0 0.0
    %488 = vmatprep.subr.mxu0 0.0
    %489 = vmatpush1.msra.mxu0 0.0
    %490 = vmatprep.subr.mxu0 0.0
    %491 = vmatpush1.msra.mxu0 0.0
    %492 = vmatprep.subr.mxu0 0.0
    %493 = vmatpush1.msra.mxu0 0.0
    %494 = vmatprep.subr.mxu0 0.0
    %495 = vmatpush1.msra.mxu0 0.0
    %496 = vmatprep.subr.mxu0 0.0
    %497 = vmatpush1.msra.mxu0 0.0
    %498 = vmatprep.subr.mxu0 0.0
    %499 = vmatpush1.msra.mxu0 0.0
    %500 = vmatprep.subr.mxu0 0.0
    %501 = vmatpush1.msra.mxu0 0.0
    %502 = vmatprep.subr.mxu0 0.0
    %503 = vmatpush1.msra.mxu0 0.0
    %504 = vmatprep.subr.mxu0 0.0
    %505 = vmatpush1.msra.mxu0 0.0
    %506 = vmatprep.subr.mxu0 0.0
    %507 = vmatpush1.msra.mxu0 0.0
    %508 = vmatprep.subr.mxu0 %v395
    %509 = vmatpush1.msra.mxu0 %v392
    %510 = vmatprep.subr.mxu0 %v50
    %511 = vmatpush1.msra.mxu0 %v49
    %512 = vmatprep.subr.mxu0 0.0
    %513 = vmatpush2.msra.mxu0 0.0
    %514 = vmatprep.subr.mxu0 0.0
    %515 = vmatpush2.msra.mxu0 0.0
    %516 = vmatprep.subr.mxu0 0.0
    %517 = vmatpush2.msra.mxu0 0.0
    %518 = vmatprep.subr.mxu0 0.0
    %519 = vmatpush2.msra.mxu0 0.0
    %520 = vmatprep.subr.mxu0 0.0
    %521 = vmatpush2.msra.mxu0 0.0
    %522 = vmatprep.subr.mxu0 0.0
    %523 = vmatpush2.msra.mxu0 0.0
    %524 = vmatprep.subr.mxu0 0.0
    %525 = vmatpush2.msra.mxu0 0.0
    %526 = vmatprep.subr.mxu0 0.0
    %527 = vmatpush2.msra.mxu0 0.0
    %528 = vmatprep.subr.mxu0 0.0
    %529 = vmatpush2.msra.mxu0 0.0
    %530 = vmatprep.subr.mxu0 0.0
    %531 = vmatpush2.msra.mxu0 0.0
    %532 = vmatprep.subr.mxu0 0.0
    %533 = vmatpush2.msra.mxu0 0.0
    %534 = vmatprep.subr.mxu0 0.0
    %535 = vmatpush2.msra.mxu0 0.0
    %536 = vmatprep.subr.mxu0 0.0
    %537 = vmatpush2.msra.mxu0 0.0
    %538 = vmatprep.subr.mxu0 0.0
    %539 = vmatpush2.msra.mxu0 0.0
    %540 = vmatprep.subr.mxu0 0.0
    %541 = vmatpush2.msra.mxu0 0.0
    %542 = vmatprep.subr.mxu0 0.0
    %543 = vmatpush2.msra.mxu0 0.0
    %544 = vmatprep.mubr.f32.mxu0 0.0
    %545 = vmatmul.mubr.f32.gmra.mxu0 %v383
    %v546 = vpop.f32.mrf.mxu0
    %v547 = vadd.f32 %v235, %v546
    %v548 = vpop.f32.mrf.mxu0
    %v549 = vadd.f32 %v237, %v548
    %550 = vdwg.mxu0
    %551 = vmatprep.subr.mxu0 0.0
    %552 = vmatpush1.msra.mxu0 0.0
    %553 = vmatprep.subr.mxu0 0.0
    %554 = vmatpush1.msra.mxu0 0.0
    %555 = vmatprep.subr.mxu0 0.0
    %556 = vmatpush1.msra.mxu0 0.0
    %557 = vmatprep.subr.mxu0 0.0
    %558 = vmatpush1.msra.mxu0 0.0
    %559 = vmatprep.subr.mxu0 0.0
    %560 = vmatpush1.msra.mxu0 0.0
    %561 = vmatprep.subr.mxu0 0.0
    %562 = vmatpush1.msra.mxu0 0.0
    %563 = vmatprep.subr.mxu0 0.0
    %564 = vmatpush1.msra.mxu0 0.0
    %565 = vmatprep.subr.mxu0 0.0
    %566 = vmatpush1.msra.mxu0 0.0
    %567 = vmatprep.subr.mxu0 0.0
    %568 = vmatpush1.msra.mxu0 0.0
    %569 = vmatprep.subr.mxu0 0.0
    %570 = vmatpush1.msra.mxu0 0.0
    %571 = vmatprep.subr.mxu0 0.0
    %572 = vmatpush1.msra.mxu0 0.0
    %573 = vmatprep.subr.mxu0 0.0
    %574 = vmatpush1.msra.mxu0 0.0
    %575 = vmatprep.subr.mxu0 0.0
    %576 = vmatpush1.msra.mxu0 0.0
    %577 = vmatprep.subr.mxu0 0.0
    %578 = vmatpush1.msra.mxu0 0.0
    %579 = vmatprep.subr.mxu0 %v401
    %580 = vmatpush1.msra.mxu0 %v398
    %581 = vmatprep.subr.mxu0 %v52
    %582 = vmatpush1.msra.mxu0 %v51
    %583 = vmatprep.subr.mxu0 0.0
    %584 = vmatpush2.msra.mxu0 0.0
    %585 = vmatprep.subr.mxu0 0.0
    %586 = vmatpush2.msra.mxu0 0.0
    %587 = vmatprep.subr.mxu0 0.0
    %588 = vmatpush2.msra.mxu0 0.0
    %589 = vmatprep.subr.mxu0 0.0
    %590 = vmatpush2.msra.mxu0 0.0
    %591 = vmatprep.subr.mxu0 0.0
    %592 = vmatpush2.msra.mxu0 0.0
    %593 = vmatprep.subr.mxu0 0.0
    %594 = vmatpush2.msra.mxu0 0.0
    %595 = vmatprep.subr.mxu0 0.0
    %596 = vmatpush2.msra.mxu0 0.0
    %597 = vmatprep.subr.mxu0 0.0
    %598 = vmatpush2.msra.mxu0 0.0
    %599 = vmatprep.subr.mxu0 0.0
    %600 = vmatpush2.msra.mxu0 0.0
    %601 = vmatprep.subr.mxu0 0.0
    %602 = vmatpush2.msra.mxu0 0.0
    %603 = vmatprep.subr.mxu0 0.0
    %604 = vmatpush2.msra.mxu0 0.0
    %605 = vmatprep.subr.mxu0 0.0
    %606 = vmatpush2.msra.mxu0 0.0
    %607 = vmatprep.subr.mxu0 0.0
    %608 = vmatpush2.msra.mxu0 0.0
    %609 = vmatprep.subr.mxu0 0.0
    %610 = vmatpush2.msra.mxu0 0.0
    %611 = vmatprep.subr.mxu0 0.0
    %612 = vmatpush2.msra.mxu0 0.0
    %613 = vmatprep.subr.mxu0 0.0
    %614 = vmatpush2.msra.mxu0 0.0
    %615 = vmatprep.mubr.f32.mxu0 0.0
    %616 = vmatmul.mubr.f32.gmra.mxu0 %v383
    %v617 = vpop.f32.mrf.mxu0
    %v618 = vadd.f32 %v306, %v617
    %v619 = vpop.f32.mrf.mxu0
    %v620 = vadd.f32 %v308, %v619
    %621 = vdwg.mxu0
    %622 = vmatprep.subr.mxu0 0.0
    %623 = vmatpush1.msra.mxu0 0.0
    %624 = vmatprep.subr.mxu0 0.0
    %625 = vmatpush1.msra.mxu0 0.0
    %626 = vmatprep.subr.mxu0 0.0
    %627 = vmatpush1.msra.mxu0 0.0
    %628 = vmatprep.subr.mxu0 0.0
    %629 = vmatpush1.msra.mxu0 0.0
    %630 = vmatprep.subr.mxu0 0.0
    %631 = vmatpush1.msra.mxu0 0.0
    %632 = vmatprep.subr.mxu0 0.0
    %633 = vmatpush1.msra.mxu0 0.0
    %634 = vmatprep.subr.mxu0 0.0
    %635 = vmatpush1.msra.mxu0 0.0
    %636 = vmatprep.subr.mxu0 0.0
    %637 = vmatpush1.msra.mxu0 0.0
    %638 = vmatprep.subr.mxu0 0.0
    %639 = vmatpush1.msra.mxu0 0.0
    %640 = vmatprep.subr.mxu0 0.0
    %641 = vmatpush1.msra.mxu0 0.0
    %642 = vmatprep.subr.mxu0 0.0
    %643 = vmatpush1.msra.mxu0 0.0
    %644 = vmatprep.subr.mxu0 0.0
    %645 = vmatpush1.msra.mxu0 0.0
    %646 = vmatprep.subr.mxu0 0.0
    %647 = vmatpush1.msra.mxu0 0.0
    %648 = vmatprep.subr.mxu0 0.0
    %649 = vmatpush1.msra.mxu0 0.0
    %650 = vmatprep.subr.mxu0 %v407
    %651 = vmatpush1.msra.mxu0 %v404
    %652 = vmatprep.subr.mxu0 %v54
    %653 = vmatpush1.msra.mxu0 %v53
    %654 = vmatprep.subr.mxu0 0.0
    %655 = vmatpush2.msra.mxu0 0.0
    %656 = vmatprep.subr.mxu0 0.0
    %657 = vmatpush2.msra.mxu0 0.0
    %658 = vmatprep.subr.mxu0 0.0
    %659 = vmatpush2.msra.mxu0 0.0
    %660 = vmatprep.subr.mxu0 0.0
    %661 = vmatpush2.msra.mxu0 0.0
    %662 = vmatprep.subr.mxu0 0.0
    %663 = vmatpush2.msra.mxu0 0.0
    %664 = vmatprep.subr.mxu0 0.0
    %665 = vmatpush2.msra.mxu0 0.0
    %666 = vmatprep.subr.mxu0 0.0
    %667 = vmatpush2.msra.mxu0 0.0
    %668 = vmatprep.subr.mxu0 0.0
    %669 = vmatpush2.msra.mxu0 0.0
    %670 = vmatprep.subr.mxu0 0.0
    %671 = vmatpush2.msra.mxu0 0.0
    %672 = vmatprep.subr.mxu0 0.0
    %673 = vmatpush2.msra.mxu0 0.0
    %674 = vmatprep.subr.mxu0 0.0
    %675 = vmatpush2.msra.mxu0 0.0
    %676 = vmatprep.subr.mxu0 0.0
    %677 = vmatpush2.msra.mxu0 0.0
    %678 = vmatprep.subr.mxu0 0.0
    %679 = vmatpush2.msra.mxu0 0.0
    %680 = vmatprep.subr.mxu0 0.0
    %681 = vmatpush2.msra.mxu0 0.0
    %682 = vmatprep.subr.mxu0 0.0
    %683 = vmatpush2.msra.mxu0 0.0
    %684 = vmatprep.subr.mxu0 0.0
    %685 = vmatpush2.msra.mxu0 0.0
    %686 = vmatprep.mubr.f32.mxu0 0.0
    %687 = vmatmul.mubr.f32.gmra.mxu0 %v383
    %v688 = vpop.f32.mrf.mxu0
    %v689 = vadd.f32 %v377, %v688
    %v690 = vpop.f32.mrf.mxu0
    %v691 = vadd.f32 %v379, %v690
    %692 = vdwg.mxu0
    %v693 = vld [vmem:[%s4] sm:$0xff]
    %v695 = vlaneseq
    %v696 = vshrl.u32 %v695, 7
    %v697 = vsub.s32 0, %v696
    %v698 = vrot.slane %v693, %v697
    %v699 = vlaneseq
    %v700 = vshrl.u32 %v699, 7
    %v701 = vsub.s32 1, %v700
    %v702 = vrot.slane %v693, %v701
    %v703 = vlaneseq
    %v704 = vshrl.u32 %v703, 7
    %v705 = vsub.s32 2, %v704
    %v706 = vrot.slane %v693, %v705
    %v707 = vlaneseq
    %v708 = vshrl.u32 %v707, 7
    %v709 = vsub.s32 3, %v708
    %v710 = vrot.slane %v693, %v709
    %v711 = vlaneseq
    %v712 = vshrl.u32 %v711, 7
    %v713 = vsub.s32 4, %v712
    %v714 = vrot.slane %v693, %v713
    %v715 = vlaneseq
    %v716 = vshrl.u32 %v715, 7
    %v717 = vsub.s32 5, %v716
    %v718 = vrot.slane %v693, %v717
    %v719 = vlaneseq
    %v720 = vshrl.u32 %v719, 7
    %v721 = vsub.s32 6, %v720
    %v722 = vrot.slane %v693, %v721
    %v723 = vlaneseq
    %v724 = vshrl.u32 %v723, 7
    %v725 = vsub.s32 7, %v724
    %v726 = vrot.slane %v693, %v725
    %v735 = vadd.f32 %v476, %v698
    %v736 = vadd.f32 %v478, %v702
    %v737 = vadd.f32 %v547, %v706
    %v738 = vadd.f32 %v549, %v710
    %v739 = vadd.f32 %v618, %v714
    %v740 = vadd.f32 %v620, %v718
    %v741 = vadd.f32 %v689, %v722
    %v742 = vadd.f32 %v691, %v726
    %v743 = vmax.f32 %v735, 0.0
    %v744 = vmax.f32 %v736, 0.0
    %v745 = vmax.f32 %v737, 0.0
    %v746 = vmax.f32 %v738, 0.0
    %v747 = vmax.f32 %v739, 0.0
    %v748 = vmax.f32 %v740, 0.0
    %v749 = vmax.f32 %v741, 0.0
    %v750 = vmax.f32 %v742, 0.0
    %v751 = vld [vmem:[#allocation2] sm:$0xff]
    %v752 = vld [vmem:[#allocation2 + $0x8] sm:$0xff]
    %v753 = vld [vmem:[#allocation2 + $0x10] sm:$0xff]
    %v754 = vld [vmem:[#allocation2 + $0x18] sm:$0xff]
    %v755 = vld [vmem:[#allocation2 + $0x20] sm:$0xff]
    %v756 = vld [vmem:[#allocation2 + $0x28] sm:$0xff]
    %v757 = vld [vmem:[#allocation2 + $0x30] sm:$0xff]
    %v758 = vld [vmem:[#allocation2 + $0x38] sm:$0xff]
    %v759 = vld [vmem:[#allocation2 + $0x40] sm:$0xff]
    %v760 = vld [vmem:[#allocation2 + $0x48] sm:$0xff]
    %v761 = vld [vmem:[#allocation2 + $0x50] sm:$0xff]
    %v762 = vld [vmem:[#allocation2 + $0x58] sm:$0xff]
    %v763 = vld [vmem:[#allocation2 + $0x60] sm:$0xff]
    %v764 = vld [vmem:[#allocation2 + $0x68] sm:$0xff]
    %v765 = vld [vmem:[#allocation2 + $0x70] sm:$0xff]
    %v766 = vld [vmem:[#allocation2 + $0x78] sm:$0xff]
    %v767 = vld [vmem:[#allocation2 + $0x80] sm:$0xff]
    %v768 = vld [vmem:[#allocation2 + $0x88] sm:$0xff]
    %v769 = vld [vmem:[#allocation2 + $0x90] sm:$0xff]
    %v770 = vld [vmem:[#allocation2 + $0x98] sm:$0xff]
    %v771 = vld [vmem:[#allocation2 + $0xa0] sm:$0xff]
    %v772 = vld [vmem:[#allocation2 + $0xa8] sm:$0xff]
    %v773 = vld [vmem:[#allocation2 + $0xb0] sm:$0xff]
    %v774 = vld [vmem:[#allocation2 + $0xb8] sm:$0xff]
    %v775 = vld [vmem:[#allocation2 + $0xc0] sm:$0xff]
    %v776 = vld [vmem:[#allocation2 + $0xc8] sm:$0xff]
    %v777 = vld [vmem:[#allocation2 + $0xd0] sm:$0xff]
    %v778 = vld [vmem:[#allocation2 + $0xd8] sm:$0xff]
    %v779 = vld [vmem:[#allocation2 + $0xe0] sm:$0xff]
    %v780 = vld [vmem:[#allocation2 + $0xe8] sm:$0xff]
    %v781 = vld [vmem:[#allocation2 + $0xf0] sm:$0xff]
    %v782 = vld [vmem:[#allocation2 + $0xf8] sm:$0xff]
    %v783 = vld [vmem:[#allocation2 + $0x100] sm:$0xff]
    %v784 = vld [vmem:[#allocation2 + $0x108] sm:$0xff]
    %v785 = vld [vmem:[#allocation2 + $0x110] sm:$0xff]
    %v786 = vld [vmem:[#allocation2 + $0x118] sm:$0xff]
    %v787 = vld [vmem:[#allocation2 + $0x120] sm:$0xff]
    %v788 = vld [vmem:[#allocation2 + $0x128] sm:$0xff]
    %v789 = vld [vmem:[#allocation2 + $0x130] sm:$0xff]
    %v790 = vld [vmem:[#allocation2 + $0x138] sm:$0xff]
    %v791 = vld [vmem:[#allocation2 + $0x140] sm:$0xff]
    %v792 = vld [vmem:[#allocation2 + $0x148] sm:$0xff]
    %v793 = vld [vmem:[#allocation2 + $0x150] sm:$0xff]
    %v794 = vld [vmem:[#allocation2 + $0x158] sm:$0xff]
    %v795 = vld [vmem:[#allocation2 + $0x160] sm:$0xff]
    %v796 = vld [vmem:[#allocation2 + $0x168] sm:$0xff]
    %v797 = vld [vmem:[#allocation2 + $0x170] sm:$0xff]
    %v798 = vld [vmem:[#allocation2 + $0x178] sm:$0xff]
    %v799 = vld [vmem:[#allocation2 + $0x180] sm:$0xff]
    %v800 = vld [vmem:[#allocation2 + $0x188] sm:$0xff]
    %v801 = vld [vmem:[#allocation2 + $0x190] sm:$0xff]
    %v802 = vld [vmem:[#allocation2 + $0x198] sm:$0xff]
    %v803 = vld [vmem:[#allocation2 + $0x1a0] sm:$0xff]
    %v804 = vld [vmem:[#allocation2 + $0x1a8] sm:$0xff]
    %v805 = vld [vmem:[#allocation2 + $0x1b0] sm:$0xff]
    %v806 = vld [vmem:[#allocation2 + $0x1b8] sm:$0xff]
    %v807 = vld [vmem:[#allocation2 + $0x1c0] sm:$0xff]
    %v808 = vld [vmem:[#allocation2 + $0x1c8] sm:$0xff]
    %v809 = vld [vmem:[#allocation2 + $0x1d0] sm:$0xff]
    %v810 = vld [vmem:[#allocation2 + $0x1d8] sm:$0xff]
    %v811 = vld [vmem:[#allocation2 + $0x1e0] sm:$0xff]
    %v812 = vld [vmem:[#allocation2 + $0x1e8] sm:$0xff]
    %v813 = vld [vmem:[#allocation2 + $0x1f0] sm:$0xff]
    %v814 = vld [vmem:[#allocation2 + $0x1f8] sm:$0xff]
    %v815 = vld [vmem:[%s6] ss:$4 sm:$0x3]
    %v817 = vlaneseq
    %v818 = vshrl.u32 %v817, 7
    %v819 = vsub.s32 0, %v818
    %v820 = vrot.slane %v815, %v819
    %v821 = vlaneseq
    %v822 = vshrl.u32 %v821, 7
    %v823 = vsub.s32 1, %v822
    %v824 = vrot.slane %v815, %v823
    %827 = vmatprep.subr.mxu0 %v782
    %828 = vmatpush1.msra.mxu0 %v781
    %829 = vmatprep.subr.mxu0 %v780
    %830 = vmatpush1.msra.mxu0 %v779
    %831 = vmatprep.subr.mxu0 %v778
    %832 = vmatpush1.msra.mxu0 %v777
    %833 = vmatprep.subr.mxu0 %v776
    %834 = vmatpush1.msra.mxu0 %v775
    %835 = vmatprep.subr.mxu0 %v774
    %836 = vmatpush1.msra.mxu0 %v773
    %837 = vmatprep.subr.mxu0 %v772
    %838 = vmatpush1.msra.mxu0 %v771
    %839 = vmatprep.subr.mxu0 %v770
    %840 = vmatpush1.msra.mxu0 %v769
    %841 = vmatprep.subr.mxu0 %v768
    %842 = vmatpush1.msra.mxu0 %v767
    %843 = vmatprep.subr.mxu0 %v766
    %844 = vmatpush1.msra.mxu0 %v765
    %845 = vmatprep.subr.mxu0 %v764
    %846 = vmatpush1.msra.mxu0 %v763
    %847 = vmatprep.subr.mxu0 %v762
    %848 = vmatpush1.msra.mxu0 %v761
    %849 = vmatprep.subr.mxu0 %v760
    %850 = vmatpush1.msra.mxu0 %v759
    %851 = vmatprep.subr.mxu0 %v758
    %852 = vmatpush1.msra.mxu0 %v757
    %853 = vmatprep.subr.mxu0 %v756
    %854 = vmatpush1.msra.mxu0 %v755
    %855 = vmatprep.subr.mxu0 %v754
    %856 = vmatpush1.msra.mxu0 %v753
    %857 = vmatprep.subr.mxu0 %v752
    %858 = vmatpush1.msra.mxu0 %v751
    %859 = vmatprep.subr.mxu0 %v814
    %860 = vmatpush2.msra.mxu0 %v813
    %861 = vmatprep.subr.mxu0 %v812
    %862 = vmatpush2.msra.mxu0 %v811
    %863 = vmatprep.subr.mxu0 %v810
    %864 = vmatpush2.msra.mxu0 %v809
    %865 = vmatprep.subr.mxu0 %v808
    %866 = vmatpush2.msra.mxu0 %v807
    %867 = vmatprep.subr.mxu0 %v806
    %868 = vmatpush2.msra.mxu0 %v805
    %869 = vmatprep.subr.mxu0 %v804
    %870 = vmatpush2.msra.mxu0 %v803
    %871 = vmatprep.subr.mxu0 %v802
    %872 = vmatpush2.msra.mxu0 %v801
    %873 = vmatprep.subr.mxu0 %v800
    %874 = vmatpush2.msra.mxu0 %v799
    %875 = vmatprep.subr.mxu0 %v798
    %876 = vmatpush2.msra.mxu0 %v797
    %877 = vmatprep.subr.mxu0 %v796
    %878 = vmatpush2.msra.mxu0 %v795
    %879 = vmatprep.subr.mxu0 %v794
    %880 = vmatpush2.msra.mxu0 %v793
    %881 = vmatprep.subr.mxu0 %v792
    %882 = vmatpush2.msra.mxu0 %v791
    %883 = vmatprep.subr.mxu0 %v790
    %884 = vmatpush2.msra.mxu0 %v789
    %885 = vmatprep.subr.mxu0 %v788
    %886 = vmatpush2.msra.mxu0 %v787
    %887 = vmatprep.subr.mxu0 %v786
    %888 = vmatpush2.msra.mxu0 %v785
    %889 = vmatprep.subr.mxu0 %v784
    %890 = vmatpush2.msra.mxu0 %v783
    %891 = vmatprep.mubr.f32.mxu0 %v744
    %892 = vmatmul.mubr.f32.gmra.mxu0 %v743
    %v893 = vpop.f32.mrf.mxu0
    %v894 = vadd.f32 %v820, %v893
    %v895 = vpop.f32.mrf.mxu0
    %v896 = vadd.f32 %v824, %v895
    %897 = vdwg.mxu0
    %v898 = vmax.f32 %v894, 0.0
    %v899 = vmax.f32 %v896, 0.0
    %s900 = scalar_lea.vmem [#allocation2], 512
    %v901 = vld [vmem:[%s900] sm:$0xff]
    %v902 = vld [vmem:[%s900 + $0x8] sm:$0xff]
    %v903 = vld [vmem:[%s900 + $0x10] sm:$0xff]
    %v904 = vld [vmem:[%s900 + $0x18] sm:$0xff]
    %v905 = vld [vmem:[%s900 + $0x20] sm:$0xff]
    %v906 = vld [vmem:[%s900 + $0x28] sm:$0xff]
    %v907 = vld [vmem:[%s900 + $0x30] sm:$0xff]
    %v908 = vld [vmem:[%s900 + $0x38] sm:$0xff]
    %v909 = vld [vmem:[%s900 + $0x40] sm:$0xff]
    %v910 = vld [vmem:[%s900 + $0x48] sm:$0xff]
    %v911 = vld [vmem:[%s900 + $0x50] sm:$0xff]
    %v912 = vld [vmem:[%s900 + $0x58] sm:$0xff]
    %v913 = vld [vmem:[%s900 + $0x60] sm:$0xff]
    %v914 = vld [vmem:[%s900 + $0x68] sm:$0xff]
    %v915 = vld [vmem:[%s900 + $0x70] sm:$0xff]
    %v916 = vld [vmem:[%s900 + $0x78] sm:$0xff]
    %v917 = vld [vmem:[%s900 + $0x80] sm:$0xff]
    %v918 = vld [vmem:[%s900 + $0x88] sm:$0xff]
    %v919 = vld [vmem:[%s900 + $0x90] sm:$0xff]
    %v920 = vld [vmem:[%s900 + $0x98] sm:$0xff]
    %v921 = vld [vmem:[%s900 + $0xa0] sm:$0xff]
    %v922 = vld [vmem:[%s900 + $0xa8] sm:$0xff]
    %v923 = vld [vmem:[%s900 + $0xb0] sm:$0xff]
    %v924 = vld [vmem:[%s900 + $0xb8] sm:$0xff]
    %v925 = vld [vmem:[%s900 + $0xc0] sm:$0xff]
    %v926 = vld [vmem:[%s900 + $0xc8] sm:$0xff]
    %v927 = vld [vmem:[%s900 + $0xd0] sm:$0xff]
    %v928 = vld [vmem:[%s900 + $0xd8] sm:$0xff]
    %v929 = vld [vmem:[%s900 + $0xe0] sm:$0xff]
    %v930 = vld [vmem:[%s900 + $0xe8] sm:$0xff]
    %v931 = vld [vmem:[%s900 + $0xf0] sm:$0xff]
    %v932 = vld [vmem:[%s900 + $0xf8] sm:$0xff]
    %v933 = vld [vmem:[%s900 + $0x100] sm:$0xff]
    %v934 = vld [vmem:[%s900 + $0x108] sm:$0xff]
    %v935 = vld [vmem:[%s900 + $0x110] sm:$0xff]
    %v936 = vld [vmem:[%s900 + $0x118] sm:$0xff]
    %v937 = vld [vmem:[%s900 + $0x120] sm:$0xff]
    %v938 = vld [vmem:[%s900 + $0x128] sm:$0xff]
    %v939 = vld [vmem:[%s900 + $0x130] sm:$0xff]
    %v940 = vld [vmem:[%s900 + $0x138] sm:$0xff]
    %v941 = vld [vmem:[%s900 + $0x140] sm:$0xff]
    %v942 = vld [vmem:[%s900 + $0x148] sm:$0xff]
    %v943 = vld [vmem:[%s900 + $0x150] sm:$0xff]
    %v944 = vld [vmem:[%s900 + $0x158] sm:$0xff]
    %v945 = vld [vmem:[%s900 + $0x160] sm:$0xff]
    %v946 = vld [vmem:[%s900 + $0x168] sm:$0xff]
    %v947 = vld [vmem:[%s900 + $0x170] sm:$0xff]
    %v948 = vld [vmem:[%s900 + $0x178] sm:$0xff]
    %v949 = vld [vmem:[%s900 + $0x180] sm:$0xff]
    %v950 = vld [vmem:[%s900 + $0x188] sm:$0xff]
    %v951 = vld [vmem:[%s900 + $0x190] sm:$0xff]
    %v952 = vld [vmem:[%s900 + $0x198] sm:$0xff]
    %v953 = vld [vmem:[%s900 + $0x1a0] sm:$0xff]
    %v954 = vld [vmem:[%s900 + $0x1a8] sm:$0xff]
    %v955 = vld [vmem:[%s900 + $0x1b0] sm:$0xff]
    %v956 = vld [vmem:[%s900 + $0x1b8] sm:$0xff]
    %v957 = vld [vmem:[%s900 + $0x1c0] sm:$0xff]
    %v958 = vld [vmem:[%s900 + $0x1c8] sm:$0xff]
    %v959 = vld [vmem:[%s900 + $0x1d0] sm:$0xff]
    %v960 = vld [vmem:[%s900 + $0x1d8] sm:$0xff]
    %v961 = vld [vmem:[%s900 + $0x1e0] sm:$0xff]
    %v962 = vld [vmem:[%s900 + $0x1e8] sm:$0xff]
    %v963 = vld [vmem:[%s900 + $0x1f0] sm:$0xff]
    %v964 = vld [vmem:[%s900 + $0x1f8] sm:$0xff]
    %s965 = scalar_lea.vmem %s6, 1
    %v966 = vld [vmem:[%s965] ss:$4 sm:$0x3]
    %v968 = vlaneseq
    %v969 = vshrl.u32 %v968, 7
    %v970 = vsub.s32 0, %v969
    %v971 = vrot.slane %v966, %v970
    %v972 = vlaneseq
    %v973 = vshrl.u32 %v972, 7
    %v974 = vsub.s32 1, %v973
    %v975 = vrot.slane %v966, %v974
    %978 = vmatprep.subr.mxu0 %v932
    %979 = vmatpush1.msra.mxu0 %v931
    %980 = vmatprep.subr.mxu0 %v930
    %981 = vmatpush1.msra.mxu0 %v929
    %982 = vmatprep.subr.mxu0 %v928
    %983 = vmatpush1.msra.mxu0 %v927
    %984 = vmatprep.subr.mxu0 %v926
    %985 = vmatpush1.msra.mxu0 %v925
    %986 = vmatprep.subr.mxu0 %v924
    %987 = vmatpush1.msra.mxu0 %v923
    %988 = vmatprep.subr.mxu0 %v922
    %989 = vmatpush1.msra.mxu0 %v921
    %990 = vmatprep.subr.mxu0 %v920
    %991 = vmatpush1.msra.mxu0 %v919
    %992 = vmatprep.subr.mxu0 %v918
    %993 = vmatpush1.msra.mxu0 %v917
    %994 = vmatprep.subr.mxu0 %v916
    %995 = vmatpush1.msra.mxu0 %v915
    %996 = vmatprep.subr.mxu0 %v914
    %997 = vmatpush1.msra.mxu0 %v913
    %998 = vmatprep.subr.mxu0 %v912
    %999 = vmatpush1.msra.mxu0 %v911
    %1000 = vmatprep.subr.mxu0 %v910
    %1001 = vmatpush1.msra.mxu0 %v909
    %1002 = vmatprep.subr.mxu0 %v908
    %1003 = vmatpush1.msra.mxu0 %v907
    %1004 = vmatprep.subr.mxu0 %v906
    %1005 = vmatpush1.msra.mxu0 %v905
    %1006 = vmatprep.subr.mxu0 %v904
    %1007 = vmatpush1.msra.mxu0 %v903
    %1008 = vmatprep.subr.mxu0 %v902
    %1009 = vmatpush1.msra.mxu0 %v901
    %1010 = vmatprep.subr.mxu0 %v964
    %1011 = vmatpush2.msra.mxu0 %v963
    %1012 = vmatprep.subr.mxu0 %v962
    %1013 = vmatpush2.msra.mxu0 %v961
    %1014 = vmatprep.subr.mxu0 %v960
    %1015 = vmatpush2.msra.mxu0 %v959
    %1016 = vmatprep.subr.mxu0 %v958
    %1017 = vmatpush2.msra.mxu0 %v957
    %1018 = vmatprep.subr.mxu0 %v956
    %1019 = vmatpush2.msra.mxu0 %v955
    %1020 = vmatprep.subr.mxu0 %v954
    %1021 = vmatpush2.msra.mxu0 %v953
    %1022 = vmatprep.subr.mxu0 %v952
    %1023 = vmatpush2.msra.mxu0 %v951
    %1024 = vmatprep.subr.mxu0 %v950
    %1025 = vmatpush2.msra.mxu0 %v949
    %1026 = vmatprep.subr.mxu0 %v948
    %1027 = vmatpush2.msra.mxu0 %v947
    %1028 = vmatprep.subr.mxu0 %v946
    %1029 = vmatpush2.msra.mxu0 %v945
    %1030 = vmatprep.subr.mxu0 %v944
    %1031 = vmatpush2.msra.mxu0 %v943
    %1032 = vmatprep.subr.mxu0 %v942
    %1033 = vmatpush2.msra.mxu0 %v941
    %1034 = vmatprep.subr.mxu0 %v940
    %1035 = vmatpush2.msra.mxu0 %v939
    %1036 = vmatprep.subr.mxu0 %v938
    %1037 = vmatpush2.msra.mxu0 %v937
    %1038 = vmatprep.subr.mxu0 %v936
    %1039 = vmatpush2.msra.mxu0 %v935
    %1040 = vmatprep.subr.mxu0 %v934
    %1041 = vmatpush2.msra.mxu0 %v933
    %1042 = vmatprep.mubr.f32.mxu0 %v746
    %1043 = vmatmul.mubr.f32.gmra.mxu0 %v745
    %v1044 = vpop.f32.mrf.mxu0
    %v1045 = vadd.f32 %v971, %v1044
    %v1046 = vpop.f32.mrf.mxu0
    %v1047 = vadd.f32 %v975, %v1046
    %1048 = vdwg.mxu0
    %v1049 = vmax.f32 %v1045, 0.0
    %v1050 = vmax.f32 %v1047, 0.0
    %s1051 = scalar_lea.vmem [#allocation2], 1024
    %v1052 = vld [vmem:[%s1051] sm:$0xff]
    %v1053 = vld [vmem:[%s1051 + $0x8] sm:$0xff]
    %v1054 = vld [vmem:[%s1051 + $0x10] sm:$0xff]
    %v1055 = vld [vmem:[%s1051 + $0x18] sm:$0xff]
    %v1056 = vld [vmem:[%s1051 + $0x20] sm:$0xff]
    %v1057 = vld [vmem:[%s1051 + $0x28] sm:$0xff]
    %v1058 = vld [vmem:[%s1051 + $0x30] sm:$0xff]
    %v1059 = vld [vmem:[%s1051 + $0x38] sm:$0xff]
    %v1060 = vld [vmem:[%s1051 + $0x40] sm:$0xff]
    %v1061 = vld [vmem:[%s1051 + $0x48] sm:$0xff]
    %v1062 = vld [vmem:[%s1051 + $0x50] sm:$0xff]
    %v1063 = vld [vmem:[%s1051 + $0x58] sm:$0xff]
    %v1064 = vld [vmem:[%s1051 + $0x60] sm:$0xff]
    %v1065 = vld [vmem:[%s1051 + $0x68] sm:$0xff]
    %v1066 = vld [vmem:[%s1051 + $0x70] sm:$0xff]
    %v1067 = vld [vmem:[%s1051 + $0x78] sm:$0xff]
    %v1068 = vld [vmem:[%s1051 + $0x80] sm:$0xff]
    %v1069 = vld [vmem:[%s1051 + $0x88] sm:$0xff]
    %v1070 = vld [vmem:[%s1051 + $0x90] sm:$0xff]
    %v1071 = vld [vmem:[%s1051 + $0x98] sm:$0xff]
    %v1072 = vld [vmem:[%s1051 + $0xa0] sm:$0xff]
    %v1073 = vld [vmem:[%s1051 + $0xa8] sm:$0xff]
    %v1074 = vld [vmem:[%s1051 + $0xb0] sm:$0xff]
    %v1075 = vld [vmem:[%s1051 + $0xb8] sm:$0xff]
    %v1076 = vld [vmem:[%s1051 + $0xc0] sm:$0xff]
    %v1077 = vld [vmem:[%s1051 + $0xc8] sm:$0xff]
    %v1078 = vld [vmem:[%s1051 + $0xd0] sm:$0xff]
    %v1079 = vld [vmem:[%s1051 + $0xd8] sm:$0xff]
    %v1080 = vld [vmem:[%s1051 + $0xe0] sm:$0xff]
    %v1081 = vld [vmem:[%s1051 + $0xe8] sm:$0xff]
    %v1082 = vld [vmem:[%s1051 + $0xf0] sm:$0xff]
    %v1083 = vld [vmem:[%s1051 + $0xf8] sm:$0xff]
    %v1084 = vld [vmem:[%s1051 + $0x100] sm:$0xff]
    %v1085 = vld [vmem:[%s1051 + $0x108] sm:$0xff]
    %v1086 = vld [vmem:[%s1051 + $0x110] sm:$0xff]
    %v1087 = vld [vmem:[%s1051 + $0x118] sm:$0xff]
    %v1088 = vld [vmem:[%s1051 + $0x120] sm:$0xff]
    %v1089 = vld [vmem:[%s1051 + $0x128] sm:$0xff]
    %v1090 = vld [vmem:[%s1051 + $0x130] sm:$0xff]
    %v1091 = vld [vmem:[%s1051 + $0x138] sm:$0xff]
    %v1092 = vld [vmem:[%s1051 + $0x140] sm:$0xff]
    %v1093 = vld [vmem:[%s1051 + $0x148] sm:$0xff]
    %v1094 = vld [vmem:[%s1051 + $0x150] sm:$0xff]
    %v1095 = vld [vmem:[%s1051 + $0x158] sm:$0xff]
    %v1096 = vld [vmem:[%s1051 + $0x160] sm:$0xff]
    %v1097 = vld [vmem:[%s1051 + $0x168] sm:$0xff]
    %v1098 = vld [vmem:[%s1051 + $0x170] sm:$0xff]
    %v1099 = vld [vmem:[%s1051 + $0x178] sm:$0xff]
    %v1100 = vld [vmem:[%s1051 + $0x180] sm:$0xff]
    %v1101 = vld [vmem:[%s1051 + $0x188] sm:$0xff]
    %v1102 = vld [vmem:[%s1051 + $0x190] sm:$0xff]
    %v1103 = vld [vmem:[%s1051 + $0x198] sm:$0xff]
    %v1104 = vld [vmem:[%s1051 + $0x1a0] sm:$0xff]
    %v1105 = vld [vmem:[%s1051 + $0x1a8] sm:$0xff]
    %v1106 = vld [vmem:[%s1051 + $0x1b0] sm:$0xff]
    %v1107 = vld [vmem:[%s1051 + $0x1b8] sm:$0xff]
    %v1108 = vld [vmem:[%s1051 + $0x1c0] sm:$0xff]
    %v1109 = vld [vmem:[%s1051 + $0x1c8] sm:$0xff]
    %v1110 = vld [vmem:[%s1051 + $0x1d0] sm:$0xff]
    %v1111 = vld [vmem:[%s1051 + $0x1d8] sm:$0xff]
    %v1112 = vld [vmem:[%s1051 + $0x1e0] sm:$0xff]
    %v1113 = vld [vmem:[%s1051 + $0x1e8] sm:$0xff]
    %v1114 = vld [vmem:[%s1051 + $0x1f0] sm:$0xff]
    %v1115 = vld [vmem:[%s1051 + $0x1f8] sm:$0xff]
    %s1116 = scalar_lea.vmem %s6, 2
    %v1117 = vld [vmem:[%s1116] ss:$4 sm:$0x3]
    %v1119 = vlaneseq
    %v1120 = vshrl.u32 %v1119, 7
    %v1121 = vsub.s32 0, %v1120
    %v1122 = vrot.slane %v1117, %v1121
    %v1123 = vlaneseq
    %v1124 = vshrl.u32 %v1123, 7
    %v1125 = vsub.s32 1, %v1124
    %v1126 = vrot.slane %v1117, %v1125
    %1129 = vmatprep.subr.mxu0 %v1083
    %1130 = vmatpush1.msra.mxu0 %v1082
    %1131 = vmatprep.subr.mxu0 %v1081
    %1132 = vmatpush1.msra.mxu0 %v1080
    %1133 = vmatprep.subr.mxu0 %v1079
    %1134 = vmatpush1.msra.mxu0 %v1078
    %1135 = vmatprep.subr.mxu0 %v1077
    %1136 = vmatpush1.msra.mxu0 %v1076
    %1137 = vmatprep.subr.mxu0 %v1075
    %1138 = vmatpush1.msra.mxu0 %v1074
    %1139 = vmatprep.subr.mxu0 %v1073
    %1140 = vmatpush1.msra.mxu0 %v1072
    %1141 = vmatprep.subr.mxu0 %v1071
    %1142 = vmatpush1.msra.mxu0 %v1070
    %1143 = vmatprep.subr.mxu0 %v1069
    %1144 = vmatpush1.msra.mxu0 %v1068
    %1145 = vmatprep.subr.mxu0 %v1067
    %1146 = vmatpush1.msra.mxu0 %v1066
    %1147 = vmatprep.subr.mxu0 %v1065
    %1148 = vmatpush1.msra.mxu0 %v1064
    %1149 = vmatprep.subr.mxu0 %v1063
    %1150 = vmatpush1.msra.mxu0 %v1062
    %1151 = vmatprep.subr.mxu0 %v1061
    %1152 = vmatpush1.msra.mxu0 %v1060
    %1153 = vmatprep.subr.mxu0 %v1059
    %1154 = vmatpush1.msra.mxu0 %v1058
    %1155 = vmatprep.subr.mxu0 %v1057
    %1156 = vmatpush1.msra.mxu0 %v1056
    %1157 = vmatprep.subr.mxu0 %v1055
    %1158 = vmatpush1.msra.mxu0 %v1054
    %1159 = vmatprep.subr.mxu0 %v1053
    %1160 = vmatpush1.msra.mxu0 %v1052
    %1161 = vmatprep.subr.mxu0 %v1115
    %1162 = vmatpush2.msra.mxu0 %v1114
    %1163 = vmatprep.subr.mxu0 %v1113
    %1164 = vmatpush2.msra.mxu0 %v1112
    %1165 = vmatprep.subr.mxu0 %v1111
    %1166 = vmatpush2.msra.mxu0 %v1110
    %1167 = vmatprep.subr.mxu0 %v1109
    %1168 = vmatpush2.msra.mxu0 %v1108
    %1169 = vmatprep.subr.mxu0 %v1107
    %1170 = vmatpush2.msra.mxu0 %v1106
    %1171 = vmatprep.subr.mxu0 %v1105
    %1172 = vmatpush2.msra.mxu0 %v1104
    %1173 = vmatprep.subr.mxu0 %v1103
    %1174 = vmatpush2.msra.mxu0 %v1102
    %1175 = vmatprep.subr.mxu0 %v1101
    %1176 = vmatpush2.msra.mxu0 %v1100
    %1177 = vmatprep.subr.mxu0 %v1099
    %1178 = vmatpush2.msra.mxu0 %v1098
    %1179 = vmatprep.subr.mxu0 %v1097
    %1180 = vmatpush2.msra.mxu0 %v1096
    %1181 = vmatprep.subr.mxu0 %v1095
    %1182 = vmatpush2.msra.mxu0 %v1094
    %1183 = vmatprep.subr.mxu0 %v1093
    %1184 = vmatpush2.msra.mxu0 %v1092
    %1185 = vmatprep.subr.mxu0 %v1091
    %1186 = vmatpush2.msra.mxu0 %v1090
    %1187 = vmatprep.subr.mxu0 %v1089
    %1188 = vmatpush2.msra.mxu0 %v1088
    %1189 = vmatprep.subr.mxu0 %v1087
    %1190 = vmatpush2.msra.mxu0 %v1086
    %1191 = vmatprep.subr.mxu0 %v1085
    %1192 = vmatpush2.msra.mxu0 %v1084
    %1193 = vmatprep.mubr.f32.mxu0 %v748
    %1194 = vmatmul.mubr.f32.gmra.mxu0 %v747
    %v1195 = vpop.f32.mrf.mxu0
    %v1196 = vadd.f32 %v1122, %v1195
    %v1197 = vpop.f32.mrf.mxu0
    %v1198 = vadd.f32 %v1126, %v1197
    %1199 = vdwg.mxu0
    %v1200 = vmax.f32 %v1196, 0.0
    %v1201 = vmax.f32 %v1198, 0.0
    %s1202 = scalar_lea.vmem [#allocation2], 1536
    %v1203 = vld [vmem:[%s1202] sm:$0xff]
    %v1204 = vld [vmem:[%s1202 + $0x8] sm:$0xff]
    %v1205 = vld [vmem:[%s1202 + $0x10] sm:$0xff]
    %v1206 = vld [vmem:[%s1202 + $0x18] sm:$0xff]
    %v1207 = vld [vmem:[%s1202 + $0x20] sm:$0xff]
    %v1208 = vld [vmem:[%s1202 + $0x28] sm:$0xff]
    %v1209 = vld [vmem:[%s1202 + $0x30] sm:$0xff]
    %v1210 = vld [vmem:[%s1202 + $0x38] sm:$0xff]
    %v1211 = vld [vmem:[%s1202 + $0x40] sm:$0xff]
    %v1212 = vld [vmem:[%s1202 + $0x48] sm:$0xff]
    %v1213 = vld [vmem:[%s1202 + $0x50] sm:$0xff]
    %v1214 = vld [vmem:[%s1202 + $0x58] sm:$0xff]
    %v1215 = vld [vmem:[%s1202 + $0x60] sm:$0xff]
    %v1216 = vld [vmem:[%s1202 + $0x68] sm:$0xff]
    %v1217 = vld [vmem:[%s1202 + $0x70] sm:$0xff]
    %v1218 = vld [vmem:[%s1202 + $0x78] sm:$0xff]
    %v1219 = vld [vmem:[%s1202 + $0x80] sm:$0xff]
    %v1220 = vld [vmem:[%s1202 + $0x88] sm:$0xff]
    %v1221 = vld [vmem:[%s1202 + $0x90] sm:$0xff]
    %v1222 = vld [vmem:[%s1202 + $0x98] sm:$0xff]
    %v1223 = vld [vmem:[%s1202 + $0xa0] sm:$0xff]
    %v1224 = vld [vmem:[%s1202 + $0xa8] sm:$0xff]
    %v1225 = vld [vmem:[%s1202 + $0xb0] sm:$0xff]
    %v1226 = vld [vmem:[%s1202 + $0xb8] sm:$0xff]
    %v1227 = vld [vmem:[%s1202 + $0xc0] sm:$0xff]
    %v1228 = vld [vmem:[%s1202 + $0xc8] sm:$0xff]
    %v1229 = vld [vmem:[%s1202 + $0xd0] sm:$0xff]
    %v1230 = vld [vmem:[%s1202 + $0xd8] sm:$0xff]
    %v1231 = vld [vmem:[%s1202 + $0xe0] sm:$0xff]
    %v1232 = vld [vmem:[%s1202 + $0xe8] sm:$0xff]
    %v1233 = vld [vmem:[%s1202 + $0xf0] sm:$0xff]
    %v1234 = vld [vmem:[%s1202 + $0xf8] sm:$0xff]
    %v1235 = vld [vmem:[%s1202 + $0x100] sm:$0xff]
    %v1236 = vld [vmem:[%s1202 + $0x108] sm:$0xff]
    %v1237 = vld [vmem:[%s1202 + $0x110] sm:$0xff]
    %v1238 = vld [vmem:[%s1202 + $0x118] sm:$0xff]
    %v1239 = vld [vmem:[%s1202 + $0x120] sm:$0xff]
    %v1240 = vld [vmem:[%s1202 + $0x128] sm:$0xff]
    %v1241 = vld [vmem:[%s1202 + $0x130] sm:$0xff]
    %v1242 = vld [vmem:[%s1202 + $0x138] sm:$0xff]
    %v1243 = vld [vmem:[%s1202 + $0x140] sm:$0xff]
    %v1244 = vld [vmem:[%s1202 + $0x148] sm:$0xff]
    %v1245 = vld [vmem:[%s1202 + $0x150] sm:$0xff]
    %v1246 = vld [vmem:[%s1202 + $0x158] sm:$0xff]
    %v1247 = vld [vmem:[%s1202 + $0x160] sm:$0xff]
    %v1248 = vld [vmem:[%s1202 + $0x168] sm:$0xff]
    %v1249 = vld [vmem:[%s1202 + $0x170] sm:$0xff]
    %v1250 = vld [vmem:[%s1202 + $0x178] sm:$0xff]
    %v1251 = vld [vmem:[%s1202 + $0x180] sm:$0xff]
    %v1252 = vld [vmem:[%s1202 + $0x188] sm:$0xff]
    %v1253 = vld [vmem:[%s1202 + $0x190] sm:$0xff]
    %v1254 = vld [vmem:[%s1202 + $0x198] sm:$0xff]
    %v1255 = vld [vmem:[%s1202 + $0x1a0] sm:$0xff]
    %v1256 = vld [vmem:[%s1202 + $0x1a8] sm:$0xff]
    %v1257 = vld [vmem:[%s1202 + $0x1b0] sm:$0xff]
    %v1258 = vld [vmem:[%s1202 + $0x1b8] sm:$0xff]
    %v1259 = vld [vmem:[%s1202 + $0x1c0] sm:$0xff]
    %v1260 = vld [vmem:[%s1202 + $0x1c8] sm:$0xff]
    %v1261 = vld [vmem:[%s1202 + $0x1d0] sm:$0xff]
    %v1262 = vld [vmem:[%s1202 + $0x1d8] sm:$0xff]
    %v1263 = vld [vmem:[%s1202 + $0x1e0] sm:$0xff]
    %v1264 = vld [vmem:[%s1202 + $0x1e8] sm:$0xff]
    %v1265 = vld [vmem:[%s1202 + $0x1f0] sm:$0xff]
    %v1266 = vld [vmem:[%s1202 + $0x1f8] sm:$0xff]
    %s1267 = scalar_lea.vmem %s6, 3
    %v1268 = vld [vmem:[%s1267] ss:$4 sm:$0x3]
    %v1270 = vlaneseq
    %v1271 = vshrl.u32 %v1270, 7
    %v1272 = vsub.s32 0, %v1271
    %v1273 = vrot.slane %v1268, %v1272
    %v1274 = vlaneseq
    %v1275 = vshrl.u32 %v1274, 7
    %v1276 = vsub.s32 1, %v1275
    %v1277 = vrot.slane %v1268, %v1276
    %1280 = vmatprep.subr.mxu0 %v1234
    %1281 = vmatpush1.msra.mxu0 %v1233
    %1282 = vmatprep.subr.mxu0 %v1232
    %1283 = vmatpush1.msra.mxu0 %v1231
    %1284 = vmatprep.subr.mxu0 %v1230
    %1285 = vmatpush1.msra.mxu0 %v1229
    %1286 = vmatprep.subr.mxu0 %v1228
    %1287 = vmatpush1.msra.mxu0 %v1227
    %1288 = vmatprep.subr.mxu0 %v1226
    %1289 = vmatpush1.msra.mxu0 %v1225
    %1290 = vmatprep.subr.mxu0 %v1224
    %1291 = vmatpush1.msra.mxu0 %v1223
    %1292 = vmatprep.subr.mxu0 %v1222
    %1293 = vmatpush1.msra.mxu0 %v1221
    %1294 = vmatprep.subr.mxu0 %v1220
    %1295 = vmatpush1.msra.mxu0 %v1219
    %1296 = vmatprep.subr.mxu0 %v1218
    %1297 = vmatpush1.msra.mxu0 %v1217
    %1298 = vmatprep.subr.mxu0 %v1216
    %1299 = vmatpush1.msra.mxu0 %v1215
    %1300 = vmatprep.subr.mxu0 %v1214
    %1301 = vmatpush1.msra.mxu0 %v1213
    %1302 = vmatprep.subr.mxu0 %v1212
    %1303 = vmatpush1.msra.mxu0 %v1211
    %1304 = vmatprep.subr.mxu0 %v1210
    %1305 = vmatpush1.msra.mxu0 %v1209
    %1306 = vmatprep.subr.mxu0 %v1208
    %1307 = vmatpush1.msra.mxu0 %v1207
    %1308 = vmatprep.subr.mxu0 %v1206
    %1309 = vmatpush1.msra.mxu0 %v1205
    %1310 = vmatprep.subr.mxu0 %v1204
    %1311 = vmatpush1.msra.mxu0 %v1203
    %1312 = vmatprep.subr.mxu0 %v1266
    %1313 = vmatpush2.msra.mxu0 %v1265
    %1314 = vmatprep.subr.mxu0 %v1264
    %1315 = vmatpush2.msra.mxu0 %v1263
    %1316 = vmatprep.subr.mxu0 %v1262
    %1317 = vmatpush2.msra.mxu0 %v1261
    %1318 = vmatprep.subr.mxu0 %v1260
    %1319 = vmatpush2.msra.mxu0 %v1259
    %1320 = vmatprep.subr.mxu0 %v1258
    %1321 = vmatpush2.msra.mxu0 %v1257
    %1322 = vmatprep.subr.mxu0 %v1256
    %1323 = vmatpush2.msra.mxu0 %v1255
    %1324 = vmatprep.subr.mxu0 %v1254
    %1325 = vmatpush2.msra.mxu0 %v1253
    %1326 = vmatprep.subr.mxu0 %v1252
    %1327 = vmatpush2.msra.mxu0 %v1251
    %1328 = vmatprep.subr.mxu0 %v1250
    %1329 = vmatpush2.msra.mxu0 %v1249
    %1330 = vmatprep.subr.mxu0 %v1248
    %1331 = vmatpush2.msra.mxu0 %v1247
    %1332 = vmatprep.subr.mxu0 %v1246
    %1333 = vmatpush2.msra.mxu0 %v1245
    %1334 = vmatprep.subr.mxu0 %v1244
    %1335 = vmatpush2.msra.mxu0 %v1243
    %1336 = vmatprep.subr.mxu0 %v1242
    %1337 = vmatpush2.msra.mxu0 %v1241
    %1338 = vmatprep.subr.mxu0 %v1240
    %1339 = vmatpush2.msra.mxu0 %v1239
    %1340 = vmatprep.subr.mxu0 %v1238
    %1341 = vmatpush2.msra.mxu0 %v1237
    %1342 = vmatprep.subr.mxu0 %v1236
    %1343 = vmatpush2.msra.mxu0 %v1235
    %1344 = vmatprep.mubr.f32.mxu0 %v750
    %1345 = vmatmul.mubr.f32.gmra.mxu0 %v749
    %v1346 = vpop.f32.mrf.mxu0
    %v1347 = vadd.f32 %v1273, %v1346
    %v1348 = vpop.f32.mrf.mxu0
    %v1349 = vadd.f32 %v1277, %v1348
    %1350 = vdwg.mxu0
    %v1351 = vmax.f32 %v1347, 0.0
    %v1352 = vmax.f32 %v1349, 0.0
    %v1353 = vld [vmem:[%s7] sm:$0xff]
    %v1354 = vld [vmem:[%s7 + $0x8] sm:$0xff]
    %v1355 = vld [vmem:[%s7 + $0x10] sm:$0xff]
    %v1356 = vld [vmem:[%s7 + $0x18] sm:$0xff]
    %v1357 = vld [vmem:[%s7 + $0x20] sm:$0xff]
    %v1358 = vld [vmem:[%s7 + $0x28] sm:$0xff]
    %v1359 = vld [vmem:[%s7 + $0x30] sm:$0xff]
    %v1360 = vld [vmem:[%s7 + $0x38] sm:$0xff]
    %v1361 = vld [vmem:[%s7 + $0x40] sm:$0xff]
    %v1362 = vld [vmem:[%s7 + $0x48] sm:$0xff]
    %v1363 = vld [vmem:[%s7 + $0x50] sm:$0xff]
    %v1364 = vld [vmem:[%s7 + $0x58] sm:$0xff]
    %v1365 = vld [vmem:[%s7 + $0x60] sm:$0xff]
    %v1366 = vld [vmem:[%s7 + $0x68] sm:$0xff]
    %v1367 = vld [vmem:[%s7 + $0x70] sm:$0xff]
    %v1368 = vld [vmem:[%s7 + $0x78] sm:$0xff]
    %v1369 = vld [vmem:[%s7 + $0x80] sm:$0xff]
    %v1370 = vld [vmem:[%s7 + $0x88] sm:$0xff]
    %v1371 = vld [vmem:[%s7 + $0x90] sm:$0xff]
    %v1372 = vld [vmem:[%s7 + $0x98] sm:$0xff]
    %v1373 = vld [vmem:[%s7 + $0xa0] sm:$0xff]
    %v1374 = vld [vmem:[%s7 + $0xa8] sm:$0xff]
    %v1375 = vld [vmem:[%s7 + $0xb0] sm:$0xff]
    %v1376 = vld [vmem:[%s7 + $0xb8] sm:$0xff]
    %v1377 = vld [vmem:[%s7 + $0xc0] sm:$0xff]
    %v1378 = vld [vmem:[%s7 + $0xc8] sm:$0xff]
    %v1379 = vld [vmem:[%s7 + $0xd0] sm:$0xff]
    %v1380 = vld [vmem:[%s7 + $0xd8] sm:$0xff]
    %v1381 = vld [vmem:[%s7 + $0xe0] sm:$0xff]
    %v1382 = vld [vmem:[%s7 + $0xe8] sm:$0xff]
    %v1383 = vld [vmem:[%s7 + $0xf0] sm:$0xff]
    %v1384 = vld [vmem:[%s7 + $0xf8] sm:$0xff]
    %v1385 = vld [vmem:[%s7 + $0x100] sm:$0xff]
    %v1386 = vld [vmem:[%s7 + $0x108] sm:$0xff]
    %v1387 = vld [vmem:[%s7 + $0x110] sm:$0xff]
    %v1388 = vld [vmem:[%s7 + $0x118] sm:$0xff]
    %v1389 = vld [vmem:[%s7 + $0x120] sm:$0xff]
    %v1390 = vld [vmem:[%s7 + $0x128] sm:$0xff]
    %v1391 = vld [vmem:[%s7 + $0x130] sm:$0xff]
    %v1392 = vld [vmem:[%s7 + $0x138] sm:$0xff]
    %v1393 = vld [vmem:[%s7 + $0x140] sm:$0xff]
    %v1394 = vld [vmem:[%s7 + $0x148] sm:$0xff]
    %v1395 = vld [vmem:[%s7 + $0x150] sm:$0xff]
    %v1396 = vld [vmem:[%s7 + $0x158] sm:$0xff]
    %v1397 = vld [vmem:[%s7 + $0x160] sm:$0xff]
    %v1398 = vld [vmem:[%s7 + $0x168] sm:$0xff]
    %v1399 = vld [vmem:[%s7 + $0x170] sm:$0xff]
    %v1400 = vld [vmem:[%s7 + $0x178] sm:$0xff]
    %v1401 = vld [vmem:[%s7 + $0x180] sm:$0xff]
    %v1402 = vld [vmem:[%s7 + $0x188] sm:$0xff]
    %v1403 = vld [vmem:[%s7 + $0x190] sm:$0xff]
    %v1404 = vld [vmem:[%s7 + $0x198] sm:$0xff]
    %v1405 = vld [vmem:[%s7 + $0x1a0] sm:$0xff]
    %v1406 = vld [vmem:[%s7 + $0x1a8] sm:$0xff]
    %v1407 = vld [vmem:[%s7 + $0x1b0] sm:$0xff]
    %v1408 = vld [vmem:[%s7 + $0x1b8] sm:$0xff]
    %v1409 = vld [vmem:[%s7 + $0x1c0] sm:$0xff]
    %v1410 = vld [vmem:[%s7 + $0x1c8] sm:$0xff]
    %v1411 = vld [vmem:[%s7 + $0x1d0] sm:$0xff]
    %v1412 = vld [vmem:[%s7 + $0x1d8] sm:$0xff]
    %v1413 = vld [vmem:[%s7 + $0x1e0] sm:$0xff]
    %v1414 = vld [vmem:[%s7 + $0x1e8] sm:$0xff]
    %v1415 = vld [vmem:[%s7 + $0x1f0] sm:$0xff]
    %v1416 = vld [vmem:[%s7 + $0x1f8] sm:$0xff]
    %v1417 = vld [vmem:[%s7 + $0x200] sm:$0xff]
    %v1418 = vld [vmem:[%s7 + $0x208] sm:$0xff]
    %v1419 = vld [vmem:[%s7 + $0x210] sm:$0xff]
    %v1420 = vld [vmem:[%s7 + $0x218] sm:$0xff]
    %v1421 = vld [vmem:[%s7 + $0x220] sm:$0xff]
    %v1422 = vld [vmem:[%s7 + $0x228] sm:$0xff]
    %v1423 = vld [vmem:[%s7 + $0x230] sm:$0xff]
    %v1424 = vld [vmem:[%s7 + $0x238] sm:$0xff]
    %v1425 = vld [vmem:[%s7 + $0x240] sm:$0xff]
    %v1426 = vld [vmem:[%s7 + $0x248] sm:$0xff]
    %v1427 = vld [vmem:[%s7 + $0x250] sm:$0xff]
    %v1428 = vld [vmem:[%s7 + $0x258] sm:$0xff]
    %v1429 = vld [vmem:[%s7 + $0x260] sm:$0xff]
    %v1430 = vld [vmem:[%s7 + $0x268] sm:$0xff]
    %v1431 = vld [vmem:[%s7 + $0x270] sm:$0xff]
    %v1432 = vld [vmem:[%s7 + $0x278] sm:$0xff]
    %v1433 = vld [vmem:[%s7 + $0x280] sm:$0xff]
    %v1434 = vld [vmem:[%s7 + $0x288] sm:$0xff]
    %v1435 = vld [vmem:[%s7 + $0x290] sm:$0xff]
    %v1436 = vld [vmem:[%s7 + $0x298] sm:$0xff]
    %v1437 = vld [vmem:[%s7 + $0x2a0] sm:$0xff]
    %v1438 = vld [vmem:[%s7 + $0x2a8] sm:$0xff]
    %v1439 = vld [vmem:[%s7 + $0x2b0] sm:$0xff]
    %v1440 = vld [vmem:[%s7 + $0x2b8] sm:$0xff]
    %v1441 = vld [vmem:[%s7 + $0x2c0] sm:$0xff]
    %v1442 = vld [vmem:[%s7 + $0x2c8] sm:$0xff]
    %v1443 = vld [vmem:[%s7 + $0x2d0] sm:$0xff]
    %v1444 = vld [vmem:[%s7 + $0x2d8] sm:$0xff]
    %v1445 = vld [vmem:[%s7 + $0x2e0] sm:$0xff]
    %v1446 = vld [vmem:[%s7 + $0x2e8] sm:$0xff]
    %v1447 = vld [vmem:[%s7 + $0x2f0] sm:$0xff]
    %v1448 = vld [vmem:[%s7 + $0x2f8] sm:$0xff]
    %v1449 = vld [vmem:[%s7 + $0x300] sm:$0xff]
    %v1450 = vld [vmem:[%s7 + $0x308] sm:$0xff]
    %v1451 = vld [vmem:[%s7 + $0x310] sm:$0xff]
    %v1452 = vld [vmem:[%s7 + $0x318] sm:$0xff]
    %v1453 = vld [vmem:[%s7 + $0x320] sm:$0xff]
    %v1454 = vld [vmem:[%s7 + $0x328] sm:$0xff]
    %v1455 = vld [vmem:[%s7 + $0x330] sm:$0xff]
    %v1456 = vld [vmem:[%s7 + $0x338] sm:$0xff]
    %v1457 = vld [vmem:[%s7 + $0x340] sm:$0xff]
    %v1458 = vld [vmem:[%s7 + $0x348] sm:$0xff]
    %v1459 = vld [vmem:[%s7 + $0x350] sm:$0xff]
    %v1460 = vld [vmem:[%s7 + $0x358] sm:$0xff]
    %v1461 = vld [vmem:[%s7 + $0x360] sm:$0xff]
    %v1462 = vld [vmem:[%s7 + $0x368] sm:$0xff]
    %v1463 = vld [vmem:[%s7 + $0x370] sm:$0xff]
    %v1464 = vld [vmem:[%s7 + $0x378] sm:$0xff]
    %v1465 = vld [vmem:[%s7 + $0x380] sm:$0xff]
    %v1466 = vld [vmem:[%s7 + $0x388] sm:$0xff]
    %v1467 = vld [vmem:[%s7 + $0x390] sm:$0xff]
    %v1468 = vld [vmem:[%s7 + $0x398] sm:$0xff]
    %v1469 = vld [vmem:[%s7 + $0x3a0] sm:$0xff]
    %v1470 = vld [vmem:[%s7 + $0x3a8] sm:$0xff]
    %v1471 = vld [vmem:[%s7 + $0x3b0] sm:$0xff]
    %v1472 = vld [vmem:[%s7 + $0x3b8] sm:$0xff]
    %v1473 = vld [vmem:[%s7 + $0x3c0] sm:$0xff]
    %v1474 = vld [vmem:[%s7 + $0x3c8] sm:$0xff]
    %v1475 = vld [vmem:[%s7 + $0x3d0] sm:$0xff]
    %v1476 = vld [vmem:[%s7 + $0x3d8] sm:$0xff]
    %v1477 = vld [vmem:[%s7 + $0x3e0] sm:$0xff]
    %v1478 = vld [vmem:[%s7 + $0x3e8] sm:$0xff]
    %v1479 = vld [vmem:[%s7 + $0x3f0] sm:$0xff]
    %v1480 = vld [vmem:[%s7 + $0x3f8] sm:$0xff]
    %v1481 = vld [vmem:[%s8] sm:$0x1]
    %v1483 = vlaneseq
    %v1484 = vshrl.u32 %v1483, 7
    %v1485 = vsub.s32 0, %v1484
    %v1486 = vrot.slane %v1481, %v1485
    %1488 = vmatprep.subr.mxu0 0.0
    %1489 = vmatpush1.msra.mxu0 %v1368
    %1490 = vmatprep.subr.mxu0 0.0
    %1491 = vmatpush1.msra.mxu0 %v1367
    %1492 = vmatprep.subr.mxu0 0.0
    %1493 = vmatpush1.msra.mxu0 %v1366
    %1494 = vmatprep.subr.mxu0 0.0
    %1495 = vmatpush1.msra.mxu0 %v1365
    %1496 = vmatprep.subr.mxu0 0.0
    %1497 = vmatpush1.msra.mxu0 %v1364
    %1498 = vmatprep.subr.mxu0 0.0
    %1499 = vmatpush1.msra.mxu0 %v1363
    %1500 = vmatprep.subr.mxu0 0.0
    %1501 = vmatpush1.msra.mxu0 %v1362
    %1502 = vmatprep.subr.mxu0 0.0
    %1503 = vmatpush1.msra.mxu0 %v1361
    %1504 = vmatprep.subr.mxu0 0.0
    %1505 = vmatpush1.msra.mxu0 %v1360
    %1506 = vmatprep.subr.mxu0 0.0
    %1507 = vmatpush1.msra.mxu0 %v1359
    %1508 = vmatprep.subr.mxu0 0.0
    %1509 = vmatpush1.msra.mxu0 %v1358
    %1510 = vmatprep.subr.mxu0 0.0
    %1511 = vmatpush1.msra.mxu0 %v1357
    %1512 = vmatprep.subr.mxu0 0.0
    %1513 = vmatpush1.msra.mxu0 %v1356
    %1514 = vmatprep.subr.mxu0 0.0
    %1515 = vmatpush1.msra.mxu0 %v1355
    %1516 = vmatprep.subr.mxu0 0.0
    %1517 = vmatpush1.msra.mxu0 %v1354
    %1518 = vmatprep.subr.mxu0 0.0
    %1519 = vmatpush1.msra.mxu0 %v1353
    %1520 = vmatprep.subr.mxu0 0.0
    %1521 = vmatpush2.msra.mxu0 %v1384
    %1522 = vmatprep.subr.mxu0 0.0
    %1523 = vmatpush2.msra.mxu0 %v1383
    %1524 = vmatprep.subr.mxu0 0.0
    %1525 = vmatpush2.msra.mxu0 %v1382
    %1526 = vmatprep.subr.mxu0 0.0
    %1527 = vmatpush2.msra.mxu0 %v1381
    %1528 = vmatprep.subr.mxu0 0.0
    %1529 = vmatpush2.msra.mxu0 %v1380
    %1530 = vmatprep.subr.mxu0 0.0
    %1531 = vmatpush2.msra.mxu0 %v1379
    %1532 = vmatprep.subr.mxu0 0.0
    %1533 = vmatpush2.msra.mxu0 %v1378
    %1534 = vmatprep.subr.mxu0 0.0
    %1535 = vmatpush2.msra.mxu0 %v1377
    %1536 = vmatprep.subr.mxu0 0.0
    %1537 = vmatpush2.msra.mxu0 %v1376
    %1538 = vmatprep.subr.mxu0 0.0
    %1539 = vmatpush2.msra.mxu0 %v1375
    %1540 = vmatprep.subr.mxu0 0.0
    %1541 = vmatpush2.msra.mxu0 %v1374
    %1542 = vmatprep.subr.mxu0 0.0
    %1543 = vmatpush2.msra.mxu0 %v1373
    %1544 = vmatprep.subr.mxu0 0.0
    %1545 = vmatpush2.msra.mxu0 %v1372
    %1546 = vmatprep.subr.mxu0 0.0
    %1547 = vmatpush2.msra.mxu0 %v1371
    %1548 = vmatprep.subr.mxu0 0.0
    %1549 = vmatpush2.msra.mxu0 %v1370
    %1550 = vmatprep.subr.mxu0 0.0
    %1551 = vmatpush2.msra.mxu0 %v1369
    %1552 = vmatprep.mubr.f32.mxu0 %v899
    %1553 = vmatmul.mubr.f32.gmra.mxu0 %v898
    %v1554 = vpop.f32.mrf.mxu0
    %v1555 = vadd.f32 %v1486, %v1554
    %v1556 = vpop.f32.mrf.mxu0
    %1557 = vdwg.mxu0
    %1558 = vmatprep.subr.mxu0 0.0
    %1559 = vmatpush1.msra.mxu0 %v1400
    %1560 = vmatprep.subr.mxu0 0.0
    %1561 = vmatpush1.msra.mxu0 %v1399
    %1562 = vmatprep.subr.mxu0 0.0
    %1563 = vmatpush1.msra.mxu0 %v1398
    %1564 = vmatprep.subr.mxu0 0.0
    %1565 = vmatpush1.msra.mxu0 %v1397
    %1566 = vmatprep.subr.mxu0 0.0
    %1567 = vmatpush1.msra.mxu0 %v1396
    %1568 = vmatprep.subr.mxu0 0.0
    %1569 = vmatpush1.msra.mxu0 %v1395
    %1570 = vmatprep.subr.mxu0 0.0
    %1571 = vmatpush1.msra.mxu0 %v1394
    %1572 = vmatprep.subr.mxu0 0.0
    %1573 = vmatpush1.msra.mxu0 %v1393
    %1574 = vmatprep.subr.mxu0 0.0
    %1575 = vmatpush1.msra.mxu0 %v1392
    %1576 = vmatprep.subr.mxu0 0.0
    %1577 = vmatpush1.msra.mxu0 %v1391
    %1578 = vmatprep.subr.mxu0 0.0
    %1579 = vmatpush1.msra.mxu0 %v1390
    %1580 = vmatprep.subr.mxu0 0.0
    %1581 = vmatpush1.msra.mxu0 %v1389
    %1582 = vmatprep.subr.mxu0 0.0
    %1583 = vmatpush1.msra.mxu0 %v1388
    %1584 = vmatprep.subr.mxu0 0.0
    %1585 = vmatpush1.msra.mxu0 %v1387
    %1586 = vmatprep.subr.mxu0 0.0
    %1587 = vmatpush1.msra.mxu0 %v1386
    %1588 = vmatprep.subr.mxu0 0.0
    %1589 = vmatpush1.msra.mxu0 %v1385
    %1590 = vmatprep.subr.mxu0 0.0
    %1591 = vmatpush2.msra.mxu0 %v1416
    %1592 = vmatprep.subr.mxu0 0.0
    %1593 = vmatpush2.msra.mxu0 %v1415
    %1594 = vmatprep.subr.mxu0 0.0
    %1595 = vmatpush2.msra.mxu0 %v1414
    %1596 = vmatprep.subr.mxu0 0.0
    %1597 = vmatpush2.msra.mxu0 %v1413
    %1598 = vmatprep.subr.mxu0 0.0
    %1599 = vmatpush2.msra.mxu0 %v1412
    %1600 = vmatprep.subr.mxu0 0.0
    %1601 = vmatpush2.msra.mxu0 %v1411
    %1602 = vmatprep.subr.mxu0 0.0
    %1603 = vmatpush2.msra.mxu0 %v1410
    %1604 = vmatprep.subr.mxu0 0.0
    %1605 = vmatpush2.msra.mxu0 %v1409
    %1606 = vmatprep.subr.mxu0 0.0
    %1607 = vmatpush2.msra.mxu0 %v1408
    %1608 = vmatprep.subr.mxu0 0.0
    %1609 = vmatpush2.msra.mxu0 %v1407
    %1610 = vmatprep.subr.mxu0 0.0
    %1611 = vmatpush2.msra.mxu0 %v1406
    %1612 = vmatprep.subr.mxu0 0.0
    %1613 = vmatpush2.msra.mxu0 %v1405
    %1614 = vmatprep.subr.mxu0 0.0
    %1615 = vmatpush2.msra.mxu0 %v1404
    %1616 = vmatprep.subr.mxu0 0.0
    %1617 = vmatpush2.msra.mxu0 %v1403
    %1618 = vmatprep.subr.mxu0 0.0
    %1619 = vmatpush2.msra.mxu0 %v1402
    %1620 = vmatprep.subr.mxu0 0.0
    %1621 = vmatpush2.msra.mxu0 %v1401
    %1622 = vmatprep.mubr.f32.mxu0 %v1050
    %1623 = vmatmul.mubr.f32.gmra.mxu0 %v1049
    %v1624 = vpop.f32.mrf.mxu0
    %v1625 = vadd.f32 %v1555, %v1624
    %v1626 = vpop.f32.mrf.mxu0
    %1627 = vdwg.mxu0
    %1628 = vmatprep.subr.mxu0 0.0
    %1629 = vmatpush1.msra.mxu0 %v1432
    %1630 = vmatprep.subr.mxu0 0.0
    %1631 = vmatpush1.msra.mxu0 %v1431
    %1632 = vmatprep.subr.mxu0 0.0
    %1633 = vmatpush1.msra.mxu0 %v1430
    %1634 = vmatprep.subr.mxu0 0.0
    %1635 = vmatpush1.msra.mxu0 %v1429
    %1636 = vmatprep.subr.mxu0 0.0
    %1637 = vmatpush1.msra.mxu0 %v1428
    %1638 = vmatprep.subr.mxu0 0.0
    %1639 = vmatpush1.msra.mxu0 %v1427
    %1640 = vmatprep.subr.mxu0 0.0
    %1641 = vmatpush1.msra.mxu0 %v1426
    %1642 = vmatprep.subr.mxu0 0.0
    %1643 = vmatpush1.msra.mxu0 %v1425
    %1644 = vmatprep.subr.mxu0 0.0
    %1645 = vmatpush1.msra.mxu0 %v1424
    %1646 = vmatprep.subr.mxu0 0.0
    %1647 = vmatpush1.msra.mxu0 %v1423
    %1648 = vmatprep.subr.mxu0 0.0
    %1649 = vmatpush1.msra.mxu0 %v1422
    %1650 = vmatprep.subr.mxu0 0.0
    %1651 = vmatpush1.msra.mxu0 %v1421
    %1652 = vmatprep.subr.mxu0 0.0
    %1653 = vmatpush1.msra.mxu0 %v1420
    %1654 = vmatprep.subr.mxu0 0.0
    %1655 = vmatpush1.msra.mxu0 %v1419
    %1656 = vmatprep.subr.mxu0 0.0
    %1657 = vmatpush1.msra.mxu0 %v1418
    %1658 = vmatprep.subr.mxu0 0.0
    %1659 = vmatpush1.msra.mxu0 %v1417
    %1660 = vmatprep.subr.mxu0 0.0
    %1661 = vmatpush2.msra.mxu0 %v1448
    %1662 = vmatprep.subr.mxu0 0.0
    %1663 = vmatpush2.msra.mxu0 %v1447
    %1664 = vmatprep.subr.mxu0 0.0
    %1665 = vmatpush2.msra.mxu0 %v1446
    %1666 = vmatprep.subr.mxu0 0.0
    %1667 = vmatpush2.msra.mxu0 %v1445
    %1668 = vmatprep.subr.mxu0 0.0
    %1669 = vmatpush2.msra.mxu0 %v1444
    %1670 = vmatprep.subr.mxu0 0.0
    %1671 = vmatpush2.msra.mxu0 %v1443
    %1672 = vmatprep.subr.mxu0 0.0
    %1673 = vmatpush2.msra.mxu0 %v1442
    %1674 = vmatprep.subr.mxu0 0.0
    %1675 = vmatpush2.msra.mxu0 %v1441
    %1676 = vmatprep.subr.mxu0 0.0
    %1677 = vmatpush2.msra.mxu0 %v1440
    %1678 = vmatprep.subr.mxu0 0.0
    %1679 = vmatpush2.msra.mxu0 %v1439
    %1680 = vmatprep.subr.mxu0 0.0
    %1681 = vmatpush2.msra.mxu0 %v1438
    %1682 = vmatprep.subr.mxu0 0.0
    %1683 = vmatpush2.msra.mxu0 %v1437
    %1684 = vmatprep.subr.mxu0 0.0
    %1685 = vmatpush2.msra.mxu0 %v1436
    %1686 = vmatprep.subr.mxu0 0.0
    %1687 = vmatpush2.msra.mxu0 %v1435
    %1688 = vmatprep.subr.mxu0 0.0
    %1689 = vmatpush2.msra.mxu0 %v1434
    %1690 = vmatprep.subr.mxu0 0.0
    %1691 = vmatpush2.msra.mxu0 %v1433
    %1692 = vmatprep.mubr.f32.mxu0 %v1201
    %1693 = vmatmul.mubr.f32.gmra.mxu0 %v1200
    %v1694 = vpop.f32.mrf.mxu0
    %v1695 = vadd.f32 %v1625, %v1694
    %v1696 = vpop.f32.mrf.mxu0
    %1697 = vdwg.mxu0
    %1698 = vmatprep.subr.mxu0 0.0
    %1699 = vmatpush1.msra.mxu0 %v1464
    %1700 = vmatprep.subr.mxu0 0.0
    %1701 = vmatpush1.msra.mxu0 %v1463
    %1702 = vmatprep.subr.mxu0 0.0
    %1703 = vmatpush1.msra.mxu0 %v1462
    %1704 = vmatprep.subr.mxu0 0.0
    %1705 = vmatpush1.msra.mxu0 %v1461
    %1706 = vmatprep.subr.mxu0 0.0
    %1707 = vmatpush1.msra.mxu0 %v1460
    %1708 = vmatprep.subr.mxu0 0.0
    %1709 = vmatpush1.msra.mxu0 %v1459
    %1710 = vmatprep.subr.mxu0 0.0
    %1711 = vmatpush1.msra.mxu0 %v1458
    %1712 = vmatprep.subr.mxu0 0.0
    %1713 = vmatpush1.msra.mxu0 %v1457
    %1714 = vmatprep.subr.mxu0 0.0
    %1715 = vmatpush1.msra.mxu0 %v1456
    %1716 = vmatprep.subr.mxu0 0.0
    %1717 = vmatpush1.msra.mxu0 %v1455
    %1718 = vmatprep.subr.mxu0 0.0
    %1719 = vmatpush1.msra.mxu0 %v1454
    %1720 = vmatprep.subr.mxu0 0.0
    %1721 = vmatpush1.msra.mxu0 %v1453
    %1722 = vmatprep.subr.mxu0 0.0
    %1723 = vmatpush1.msra.mxu0 %v1452
    %1724 = vmatprep.subr.mxu0 0.0
    %1725 = vmatpush1.msra.mxu0 %v1451
    %1726 = vmatprep.subr.mxu0 0.0
    %1727 = vmatpush1.msra.mxu0 %v1450
    %1728 = vmatprep.subr.mxu0 0.0
    %1729 = vmatpush1.msra.mxu0 %v1449
    %1730 = vmatprep.subr.mxu0 0.0
    %1731 = vmatpush2.msra.mxu0 %v1480
    %1732 = vmatprep.subr.mxu0 0.0
    %1733 = vmatpush2.msra.mxu0 %v1479
    %1734 = vmatprep.subr.mxu0 0.0
    %1735 = vmatpush2.msra.mxu0 %v1478
    %1736 = vmatprep.subr.mxu0 0.0
    %1737 = vmatpush2.msra.mxu0 %v1477
    %1738 = vmatprep.subr.mxu0 0.0
    %1739 = vmatpush2.msra.mxu0 %v1476
    %1740 = vmatprep.subr.mxu0 0.0
    %1741 = vmatpush2.msra.mxu0 %v1475
    %1742 = vmatprep.subr.mxu0 0.0
    %1743 = vmatpush2.msra.mxu0 %v1474
    %1744 = vmatprep.subr.mxu0 0.0
    %1745 = vmatpush2.msra.mxu0 %v1473
    %1746 = vmatprep.subr.mxu0 0.0
    %1747 = vmatpush2.msra.mxu0 %v1472
    %1748 = vmatprep.subr.mxu0 0.0
    %1749 = vmatpush2.msra.mxu0 %v1471
    %1750 = vmatprep.subr.mxu0 0.0
    %1751 = vmatpush2.msra.mxu0 %v1470
    %1752 = vmatprep.subr.mxu0 0.0
    %1753 = vmatpush2.msra.mxu0 %v1469
    %1754 = vmatprep.subr.mxu0 0.0
    %1755 = vmatpush2.msra.mxu0 %v1468
    %1756 = vmatprep.subr.mxu0 0.0
    %1757 = vmatpush2.msra.mxu0 %v1467
    %1758 = vmatprep.subr.mxu0 0.0
    %1759 = vmatpush2.msra.mxu0 %v1466
    %1760 = vmatprep.subr.mxu0 0.0
    %1761 = vmatpush2.msra.mxu0 %v1465
    %1762 = vmatprep.mubr.f32.mxu0 %v1352
    %1763 = vmatmul.mubr.f32.gmra.mxu0 %v1351
    %v1764 = vpop.f32.mrf.mxu0
    %v1765 = vadd.f32 %v1695, %v1764
    %v1766 = vpop.f32.mrf.mxu0
    %1767 = vdwg.mxu0
    %1768 = vst.msk [vmem:[%s9] sm:$0xff] %vm76, %v1765
    // Predicated region
    $region42: #{tpu_custom_call.1} parent=1 // pred_check
      _
    $region43: #{tpu_custom_call.1} parent=1 // pred_check_branch
      %1770 = sbr.rel (0) target = $region45
    $region44: #{tpu_custom_call.1} parent=1 // pred_region
      _
    $region45: #{tpu_custom_call.1} parent=1 // pred_fallthru
      _
    // Predicated region
    $region46: #{tpu_custom_call.1} parent=1 // pred_check
      _
    $region47: #{tpu_custom_call.1} parent=1 // pred_check_branch
      %1772 = sbr.rel (0) target = $region49
    $region48: #{tpu_custom_call.1} parent=1 // pred_region
      _
    $region49: #{tpu_custom_call.1} parent=1 // pred_fallthru
      _
    %1773 = vsyncpa [#allocation3], 1

</llo_original>
